<compile_context>
chip_gen: v6e
topology: v6e:2x2x1
jax: 0.10.0
libtpu: 0.0.40
codegen_flags: <defaults>
</compile_context>

<pallas_src>
import functools

import jax
import jax.numpy as jnp
from jax import lax
from jax.experimental import pallas as pl
from jax.experimental.pallas import tpu as pltpu


def _recurrent_block_kernel(x_ref, w_ref, b_ref, o_ref, xpad_ref, *, Nb, H, WC, t):
    """One grid step == Nb batch elements, lane-merged layout (W*C on the lane axis).

    x_ref:    (Nb, H, WC)    input activations (compute dtype, e.g. bf16)
    w_ref:    (3, WC, WC)    banded conv weights with BN scale folded in (compute dtype)
    b_ref:    (1, WC)        folded conv+BN bias, f32, tiled over W
    o_ref:    (Nb, H, WC)    output, f32
    xpad_ref: (Nb, H+2, WC)  VMEM scratch: activation zero-padded along H only
    """
    # Zero only the 1-row H halo, once per grid step; the interior is overwritten every conv
    # and the W padding is implicit in the banded weight matrices.
    xpad_ref[:, 0:1, :] = jnp.zeros((Nb, 1, WC), xpad_ref.dtype)
    xpad_ref[:, H + 1:H + 2, :] = jnp.zeros((Nb, 1, WC), xpad_ref.dtype)

    bias = b_ref[...]  # (1, WC) f32, hoisted once

    def conv_bn_relu(inp_f32):
        # Write interior rows of the padded activation (cast to the MXU compute dtype).
        xpad_ref[:, 1:H + 1, :] = inp_f32.astype(xpad_ref.dtype)
        # 3 lane-dense matmuls: (Nb*H, WC) x (WC, WC), one per kh tap row.
        acc = jnp.dot(xpad_ref[:, 0:H, :].reshape(Nb * H, WC), w_ref[0],
                      preferred_element_type=jnp.float32)
        for kh in (1, 2):
            acc = acc + jnp.dot(xpad_ref[:, kh:kh + H, :].reshape(Nb * H, WC), w_ref[kh],
                                preferred_element_type=jnp.float32)
        # Folded-BN epilogue: bias add + ReLU (f32).
        y = jnp.maximum(acc + bias, 0.0)
        return y.reshape(Nb, H, WC)

    x = x_ref[...].astype(jnp.float32)      # (Nb, H, WC)
    x1 = conv_bn_relu(x)                    # i == 0: x1 = conv(x)
    # t is small (2) -> static unroll is fine; for large t switch to
    # lax.fori_loop(..., unroll=True) carrying x1 to bound live ranges.
    for _ in range(t):
        x1 = conv_bn_relu(x + x1)
    o_ref[...] = x1.astype(o_ref.dtype)


def recurrent_block(x_nchw, conv_w, conv_b, gamma, beta, run_mean, run_var,
                    t=2, eps=1e-5, batch_block=2, compute_dtype=jnp.bfloat16):
    """x_nchw: (N, C, H, W) f32; conv_w: (C, C, 3, 3); conv_b/gamma/beta/mean/var: (C,)."""
    N, C, H, W = x_nchw.shape
    WC = W * C
    nb = batch_block if (batch_block and N % batch_block == 0) else 1

    # NCHW -> NHWC -> lane-merged (N, H, W*C): index [n, h, w*C + c].
    x_lm = jnp.transpose(x_nchw, (0, 2, 3, 1)).reshape(N, H, WC).astype(compute_dtype)

    # Fold inference-mode BatchNorm into the conv weights/bias.
    scale = gamma / jnp.sqrt(run_var + eps)                          # (C,)
    w_f = conv_w.astype(jnp.float32) * scale[:, None, None, None]    # scale on c_out
    b_f = (conv_b - run_mean) * scale + beta                         # (C,)

    # Banded weight matrices: B[kh][w_in*C + c_in, w_out*C + c_out] = w_f[c_out, c_in, kh, kw]
    # with kw = w_in - w_out + 1 (zero outside [0, 2] -> implicit zero padding along W).
    taps = jnp.transpose(w_f, (2, 3, 1, 0))                          # (kh, kw, C_in, C_out)
    bands = []
    for kh in range(3):
        bk = jnp.zeros((WC, WC), jnp.float32)
        for kw in range(3):
            bk = bk + jnp.kron(jnp.eye(W, k=1 - kw, dtype=jnp.float32), taps[kh, kw])
        bands.append(bk)
    w_band = jnp.stack(bands).astype(compute_dtype)                  # (3, WC, WC)
    bias_lm = jnp.tile(b_f, W).reshape(1, WC).astype(jnp.float32)    # (1, WC)

    kernel = functools.partial(_recurrent_block_kernel, Nb=nb, H=H, WC=WC, t=t)

    out_lm = pl.pallas_call(
        kernel,
        out_shape=jax.ShapeDtypeStruct((N, H, WC), jnp.float32),
        grid_spec=pltpu.PrefetchScalarGridSpec(
            num_scalar_prefetch=0,
            grid=(N // nb,),
            in_specs=[
                pl.BlockSpec((nb, H, WC), lambda n: (n, 0, 0)),
                pl.BlockSpec((3, WC, WC), lambda n: (0, 0, 0)),
                pl.BlockSpec((1, WC), lambda n: (0, 0)),
            ],
            out_specs=pl.BlockSpec((nb, H, WC), lambda n: (n, 0, 0)),
            scratch_shapes=[pltpu.VMEM((nb, H + 2, WC), compute_dtype)],
        ),
        compiler_params=pltpu.CompilerParams(
            dimension_semantics=("parallel",)),   # batch axis is independent -> megacore/v7x
    )(x_lm, w_band, bias_lm)

    # Lane-merged (N, H, W*C) -> NHWC -> NCHW.
    return jnp.transpose(out_lm.reshape(N, H, W, C), (0, 3, 1, 2))


def reference_forward(x, w, b, gamma, beta, mean, var, t=2, eps=1e-5):
    """Pure-JAX f32 reference of the PyTorch module (eval-mode BN), NCHW."""
    def cbr(inp):
        y = lax.conv_general_dilated(
            inp, w, window_strides=(1, 1), padding="SAME",
            dimension_numbers=("NCHW", "OIHW", "NCHW"))
        y = y + b[None, :, None, None]
        y = (y - mean[None, :, None, None]) / jnp.sqrt(var + eps)[None, :, None, None]
        y = y * gamma[None, :, None, None] + beta[None, :, None, None]
        return jnp.maximum(y, 0.0)

    x1 = cbr(x)
    for _ in range(t):
        x1 = cbr(x + x1)
    return x1


if __name__ == "__main__":
    N, C, H, W, T = 4, 8, 16, 16, 2  # ch_out = 8, t = 2; W*C = 128 (lane-dense)

    key = jax.random.PRNGKey(0)
    kx, kw, kb, kg, kbe, km, kv = jax.random.split(key, 7)
    x = jax.random.normal(kx, (N, C, H, W), jnp.float32)
    conv_w = 0.1 * jax.random.normal(kw, (C, C, 3, 3), jnp.float32)
    conv_b = 0.1 * jax.random.normal(kb, (C,), jnp.float32)
    gamma = 1.0 + 0.1 * jax.random.normal(kg, (C,), jnp.float32)
    beta = 0.1 * jax.random.normal(kbe, (C,), jnp.float32)
    run_mean = 0.1 * jax.random.normal(km, (C,), jnp.float32)
    run_var = 0.5 + jnp.abs(jax.random.normal(kv, (C,), jnp.float32))

    out = recurrent_block(x, conv_w, conv_b, gamma, beta, run_mean, run_var, t=T)
    out = jax.block_until_ready(out)

    ref = reference_forward(x, conv_w, conv_b, gamma, beta, run_mean, run_var, t=T)
    assert out.shape == ref.shape == (N, C, H, W)
    max_err = float(jnp.max(jnp.abs(out - ref)))
    # bf16 MXU inputs (f32 accumulation/epilogue) -> standard bf16 tolerance.
    assert jnp.allclose(out, ref, atol=2e-2, rtol=2e-2), f"max_err={max_err}"

    print("KERNEL_OK")
</pallas_src>

<mosaic_0001>
module attributes {stable_mosaic.version = 11 : i64} {
  func.func @_recurrent_block_kernel(%arg0: i32, %arg1: memref<2x16x128xbf16, #tpu.memory_space<vmem>>, %arg2: memref<3x128x128xbf16, #tpu.memory_space<vmem>>, %arg3: memref<1x128xf32, #tpu.memory_space<vmem>>, %arg4: memref<2x16x128xf32, #tpu.memory_space<vmem>>, %arg5: memref<2x18x128xbf16, #tpu.memory_space<vmem>>) attributes {dimension_semantics = [#tpu.dimension_semantics<parallel>], iteration_bounds = array<i64: 2>, scalar_prefetch = 0 : i64, scratch_operands = 1 : i64, tpu.core_type = #tpu.core_type<tc>, window_params = [{transform_indices = @transform_0, window_bounds = array<i64: 2, 16, 128>}, {pipeline_mode = #tpu.pipeline_mode<synchronous>, transform_indices = @transform_1, window_bounds = array<i64: 3, 128, 128>}, {pipeline_mode = #tpu.pipeline_mode<synchronous>, transform_indices = @transform_2, window_bounds = array<i64: 1, 128>}, {transform_indices = @transform_3, window_bounds = array<i64: 2, 16, 128>}]} {
    %cst = arith.constant 0.000000e+00 : bf16
    %0 = vector.broadcast %cst : bf16 to vector<2x1x128xbf16>
    %c0 = arith.constant 0 : index
    %c0_0 = arith.constant 0 : index
    %c0_1 = arith.constant 0 : index
    %1 = vector.load %arg5[%c0, %c0_0, %c0_1] : memref<2x18x128xbf16, #tpu.memory_space<vmem>>, vector<2x1x128xbf16>
    tpu.vector_store %arg5[%c0, %c0_0, %c0_1], %0 {strides = array<i32>} : memref<2x18x128xbf16, #tpu.memory_space<vmem>>, vector<2x1x128xbf16>,
    %cst_2 = arith.constant 0.000000e+00 : bf16
    %2 = vector.broadcast %cst_2 : bf16 to vector<2x1x128xbf16>
    %c0_3 = arith.constant 0 : index
    %c17 = arith.constant 17 : index
    %c0_4 = arith.constant 0 : index
    %3 = vector.load %arg5[%c0_3, %c17, %c0_4] : memref<2x18x128xbf16, #tpu.memory_space<vmem>>, vector<2x1x128xbf16>
    tpu.vector_store %arg5[%c0_3, %c17, %c0_4], %2 {strides = array<i32>} : memref<2x18x128xbf16, #tpu.memory_space<vmem>>, vector<2x1x128xbf16>,
    %c0_5 = arith.constant 0 : index
    %c0_6 = arith.constant 0 : index
    %4 = vector.load %arg3[%c0_5, %c0_6] : memref<1x128xf32, #tpu.memory_space<vmem>>, vector<1x128xf32>
    %c0_7 = arith.constant 0 : index
    %c0_8 = arith.constant 0 : index
    %c0_9 = arith.constant 0 : index
    %5 = vector.load %arg1[%c0_7, %c0_8, %c0_9] : memref<2x16x128xbf16, #tpu.memory_space<vmem>>, vector<2x16x128xbf16>
    %6 = arith.extf %5 : vector<2x16x128xbf16> to vector<2x16x128xf32>
    %7 = arith.truncf %6 : vector<2x16x128xf32> to vector<2x16x128xbf16>
    %c0_10 = arith.constant 0 : index
    %c1 = arith.constant 1 : index
    %c0_11 = arith.constant 0 : index
    %8 = vector.load %arg5[%c0_10, %c1, %c0_11] : memref<2x18x128xbf16, #tpu.memory_space<vmem>>, vector<2x16x128xbf16>
    tpu.vector_store %arg5[%c0_10, %c1, %c0_11], %7 {strides = array<i32>} : memref<2x18x128xbf16, #tpu.memory_space<vmem>>, vector<2x16x128xbf16>,
    %c0_12 = arith.constant 0 : index
    %c0_13 = arith.constant 0 : index
    %c0_14 = arith.constant 0 : index
    %9 = vector.load %arg5[%c0_12, %c0_13, %c0_14] : memref<2x18x128xbf16, #tpu.memory_space<vmem>>, vector<2x16x128xbf16>
    %10 = vector.shape_cast %9 : vector<2x16x128xbf16> to vector<32x128xbf16>
    %c0_15 = arith.constant 0 : index
    %c0_16 = arith.constant 0 : index
    %c0_17 = arith.constant 0 : index
    %11 = vector.load %arg2[%c0_15, %c0_16, %c0_17] : memref<3x128x128xbf16, #tpu.memory_space<vmem>>, vector<1x128x128xbf16>
    %12 = vector.shape_cast %11 : vector<1x128x128xbf16> to vector<128x128xbf16>
    %cst_18 = arith.constant dense<0.000000e+00> : vector<32x128xf32>
    %13 = tpu.matmul %10, %12, %cst_18 {dimension_numbers = #tpu.dot_dimension_numbers<[1], [0], [0], [1], [0, 0, 1, 1], [], []>} : vector<32x128xbf16>, vector<128x128xbf16>, vector<32x128xf32> -> vector<32x128xf32>
    %c0_19 = arith.constant 0 : index
    %c1_20 = arith.constant 1 : index
    %c0_21 = arith.constant 0 : index
    %14 = vector.load %arg5[%c0_19, %c1_20, %c0_21] : memref<2x18x128xbf16, #tpu.memory_space<vmem>>, vector<2x16x128xbf16>
    %15 = vector.shape_cast %14 : vector<2x16x128xbf16> to vector<32x128xbf16>
    %c1_22 = arith.constant 1 : index
    %c0_23 = arith.constant 0 : index
    %c0_24 = arith.constant 0 : index
    %16 = vector.load %arg2[%c1_22, %c0_23, %c0_24] : memref<3x128x128xbf16, #tpu.memory_space<vmem>>, vector<1x128x128xbf16>
    %17 = vector.shape_cast %16 : vector<1x128x128xbf16> to vector<128x128xbf16>
    %cst_25 = arith.constant dense<0.000000e+00> : vector<32x128xf32>
    %18 = tpu.matmul %15, %17, %cst_25 {dimension_numbers = #tpu.dot_dimension_numbers<[1], [0], [0], [1], [0, 0, 1, 1], [], []>} : vector<32x128xbf16>, vector<128x128xbf16>, vector<32x128xf32> -> vector<32x128xf32>
    %19 = arith.addf %13, %18 : vector<32x128xf32>
    %c0_26 = arith.constant 0 : index
    %c2 = arith.constant 2 : index
    %c0_27 = arith.constant 0 : index
    %20 = vector.load %arg5[%c0_26, %c2, %c0_27] : memref<2x18x128xbf16, #tpu.memory_space<vmem>>, vector<2x16x128xbf16>
    %21 = vector.shape_cast %20 : vector<2x16x128xbf16> to vector<32x128xbf16>
    %c2_28 = arith.constant 2 : index
    %c0_29 = arith.constant 0 : index
    %c0_30 = arith.constant 0 : index
    %22 = vector.load %arg2[%c2_28, %c0_29, %c0_30] : memref<3x128x128xbf16, #tpu.memory_space<vmem>>, vector<1x128x128xbf16>
    %23 = vector.shape_cast %22 : vector<1x128x128xbf16> to vector<128x128xbf16>
    %cst_31 = arith.constant dense<0.000000e+00> : vector<32x128xf32>
    %24 = tpu.matmul %21, %23, %cst_31 {dimension_numbers = #tpu.dot_dimension_numbers<[1], [0], [0], [1], [0, 0, 1, 1], [], []>} : vector<32x128xbf16>, vector<128x128xbf16>, vector<32x128xf32> -> vector<32x128xf32>
    %25 = arith.addf %19, %24 : vector<32x128xf32>
    %26 = vector.broadcast %4 : vector<1x128xf32> to vector<32x128xf32>
    %27 = arith.addf %25, %26 : vector<32x128xf32>
    %cst_32 = arith.constant 0.000000e+00 : f32
    %28 = vector.broadcast %cst_32 : f32 to vector<32x128xf32>
    %29 = arith.maximumf %27, %28 : vector<32x128xf32>
    %30 = vector.shape_cast %29 : vector<32x128xf32> to vector<2x16x128xf32>
    %31 = arith.addf %6, %30 : vector<2x16x128xf32>
    %32 = arith.truncf %31 : vector<2x16x128xf32> to vector<2x16x128xbf16>
    %c0_33 = arith.constant 0 : index
    %c1_34 = arith.constant 1 : index
    %c0_35 = arith.constant 0 : index
    %33 = vector.load %arg5[%c0_33, %c1_34, %c0_35] : memref<2x18x128xbf16, #tpu.memory_space<vmem>>, vector<2x16x128xbf16>
    tpu.vector_store %arg5[%c0_33, %c1_34, %c0_35], %32 {strides = array<i32>} : memref<2x18x128xbf16, #tpu.memory_space<vmem>>, vector<2x16x128xbf16>,
    %c0_36 = arith.constant 0 : index
    %c0_37 = arith.constant 0 : index
    %c0_38 = arith.constant 0 : index
    %34 = vector.load %arg5[%c0_36, %c0_37, %c0_38] : memref<2x18x128xbf16, #tpu.memory_space<vmem>>, vector<2x16x128xbf16>
    %35 = vector.shape_cast %34 : vector<2x16x128xbf16> to vector<32x128xbf16>
    %c0_39 = arith.constant 0 : index
    %c0_40 = arith.constant 0 : index
    %c0_41 = arith.constant 0 : index
    %36 = vector.load %arg2[%c0_39, %c0_40, %c0_41] : memref<3x128x128xbf16, #tpu.memory_space<vmem>>, vector<1x128x128xbf16>
    %37 = vector.shape_cast %36 : vector<1x128x128xbf16> to vector<128x128xbf16>
    %cst_42 = arith.constant dense<0.000000e+00> : vector<32x128xf32>
    %38 = tpu.matmul %35, %37, %cst_42 {dimension_numbers = #tpu.dot_dimension_numbers<[1], [0], [0], [1], [0, 0, 1, 1], [], []>} : vector<32x128xbf16>, vector<128x128xbf16>, vector<32x128xf32> -> vector<32x128xf32>
    %c0_43 = arith.constant 0 : index
    %c1_44 = arith.constant 1 : index
    %c0_45 = arith.constant 0 : index
    %39 = vector.load %arg5[%c0_43, %c1_44, %c0_45] : memref<2x18x128xbf16, #tpu.memory_space<vmem>>, vector<2x16x128xbf16>
    %40 = vector.shape_cast %39 : vector<2x16x128xbf16> to vector<32x128xbf16>
    %c1_46 = arith.constant 1 : index
    %c0_47 = arith.constant 0 : index
    %c0_48 = arith.constant 0 : index
    %41 = vector.load %arg2[%c1_46, %c0_47, %c0_48] : memref<3x128x128xbf16, #tpu.memory_space<vmem>>, vector<1x128x128xbf16>
    %42 = vector.shape_cast %41 : vector<1x128x128xbf16> to vector<128x128xbf16>
    %cst_49 = arith.constant dense<0.000000e+00> : vector<32x128xf32>
    %43 = tpu.matmul %40, %42, %cst_49 {dimension_numbers = #tpu.dot_dimension_numbers<[1], [0], [0], [1], [0, 0, 1, 1], [], []>} : vector<32x128xbf16>, vector<128x128xbf16>, vector<32x128xf32> -> vector<32x128xf32>
    %44 = arith.addf %38, %43 : vector<32x128xf32>
    %c0_50 = arith.constant 0 : index
    %c2_51 = arith.constant 2 : index
    %c0_52 = arith.constant 0 : index
    %45 = vector.load %arg5[%c0_50, %c2_51, %c0_52] : memref<2x18x128xbf16, #tpu.memory_space<vmem>>, vector<2x16x128xbf16>
    %46 = vector.shape_cast %45 : vector<2x16x128xbf16> to vector<32x128xbf16>
    %c2_53 = arith.constant 2 : index
    %c0_54 = arith.constant 0 : index
    %c0_55 = arith.constant 0 : index
    %47 = vector.load %arg2[%c2_53, %c0_54, %c0_55] : memref<3x128x128xbf16, #tpu.memory_space<vmem>>, vector<1x128x128xbf16>
    %48 = vector.shape_cast %47 : vector<1x128x128xbf16> to vector<128x128xbf16>
    %cst_56 = arith.constant dense<0.000000e+00> : vector<32x128xf32>
    %49 = tpu.matmul %46, %48, %cst_56 {dimension_numbers = #tpu.dot_dimension_numbers<[1], [0], [0], [1], [0, 0, 1, 1], [], []>} : vector<32x128xbf16>, vector<128x128xbf16>, vector<32x128xf32> -> vector<32x128xf32>
    %50 = arith.addf %44, %49 : vector<32x128xf32>
    %51 = vector.broadcast %4 : vector<1x128xf32> to vector<32x128xf32>
    %52 = arith.addf %50, %51 : vector<32x128xf32>
    %cst_57 = arith.constant 0.000000e+00 : f32
    %53 = vector.broadcast %cst_57 : f32 to vector<32x128xf32>
    %54 = arith.maximumf %52, %53 : vector<32x128xf32>
    %55 = vector.shape_cast %54 : vector<32x128xf32> to vector<2x16x128xf32>
    %56 = arith.addf %6, %55 : vector<2x16x128xf32>
    %57 = arith.truncf %56 : vector<2x16x128xf32> to vector<2x16x128xbf16>
    %c0_58 = arith.constant 0 : index
    %c1_59 = arith.constant 1 : index
    %c0_60 = arith.constant 0 : index
    %58 = vector.load %arg5[%c0_58, %c1_59, %c0_60] : memref<2x18x128xbf16, #tpu.memory_space<vmem>>, vector<2x16x128xbf16>
    tpu.vector_store %arg5[%c0_58, %c1_59, %c0_60], %57 {strides = array<i32>} : memref<2x18x128xbf16, #tpu.memory_space<vmem>>, vector<2x16x128xbf16>,
    %c0_61 = arith.constant 0 : index
    %c0_62 = arith.constant 0 : index
    %c0_63 = arith.constant 0 : index
    %59 = vector.load %arg5[%c0_61, %c0_62, %c0_63] : memref<2x18x128xbf16, #tpu.memory_space<vmem>>, vector<2x16x128xbf16>
    %60 = vector.shape_cast %59 : vector<2x16x128xbf16> to vector<32x128xbf16>
    %c0_64 = arith.constant 0 : index
    %c0_65 = arith.constant 0 : index
    %c0_66 = arith.constant 0 : index
    %61 = vector.load %arg2[%c0_64, %c0_65, %c0_66] : memref<3x128x128xbf16, #tpu.memory_space<vmem>>, vector<1x128x128xbf16>
    %62 = vector.shape_cast %61 : vector<1x128x128xbf16> to vector<128x128xbf16>
    %cst_67 = arith.constant dense<0.000000e+00> : vector<32x128xf32>
    %63 = tpu.matmul %60, %62, %cst_67 {dimension_numbers = #tpu.dot_dimension_numbers<[1], [0], [0], [1], [0, 0, 1, 1], [], []>} : vector<32x128xbf16>, vector<128x128xbf16>, vector<32x128xf32> -> vector<32x128xf32>
    %c0_68 = arith.constant 0 : index
    %c1_69 = arith.constant 1 : index
    %c0_70 = arith.constant 0 : index
    %64 = vector.load %arg5[%c0_68, %c1_69, %c0_70] : memref<2x18x128xbf16, #tpu.memory_space<vmem>>, vector<2x16x128xbf16>
    %65 = vector.shape_cast %64 : vector<2x16x128xbf16> to vector<32x128xbf16>
    %c1_71 = arith.constant 1 : index
    %c0_72 = arith.constant 0 : index
    %c0_73 = arith.constant 0 : index
    %66 = vector.load %arg2[%c1_71, %c0_72, %c0_73] : memref<3x128x128xbf16, #tpu.memory_space<vmem>>, vector<1x128x128xbf16>
    %67 = vector.shape_cast %66 : vector<1x128x128xbf16> to vector<128x128xbf16>
    %cst_74 = arith.constant dense<0.000000e+00> : vector<32x128xf32>
    %68 = tpu.matmul %65, %67, %cst_74 {dimension_numbers = #tpu.dot_dimension_numbers<[1], [0], [0], [1], [0, 0, 1, 1], [], []>} : vector<32x128xbf16>, vector<128x128xbf16>, vector<32x128xf32> -> vector<32x128xf32>
    %69 = arith.addf %63, %68 : vector<32x128xf32>
    %c0_75 = arith.constant 0 : index
    %c2_76 = arith.constant 2 : index
    %c0_77 = arith.constant 0 : index
    %70 = vector.load %arg5[%c0_75, %c2_76, %c0_77] : memref<2x18x128xbf16, #tpu.memory_space<vmem>>, vector<2x16x128xbf16>
    %71 = vector.shape_cast %70 : vector<2x16x128xbf16> to vector<32x128xbf16>
    %c2_78 = arith.constant 2 : index
    %c0_79 = arith.constant 0 : index
    %c0_80 = arith.constant 0 : index
    %72 = vector.load %arg2[%c2_78, %c0_79, %c0_80] : memref<3x128x128xbf16, #tpu.memory_space<vmem>>, vector<1x128x128xbf16>
    %73 = vector.shape_cast %72 : vector<1x128x128xbf16> to vector<128x128xbf16>
    %cst_81 = arith.constant dense<0.000000e+00> : vector<32x128xf32>
    %74 = tpu.matmul %71, %73, %cst_81 {dimension_numbers = #tpu.dot_dimension_numbers<[1], [0], [0], [1], [0, 0, 1, 1], [], []>} : vector<32x128xbf16>, vector<128x128xbf16>, vector<32x128xf32> -> vector<32x128xf32>
    %75 = arith.addf %69, %74 : vector<32x128xf32>
    %76 = vector.broadcast %4 : vector<1x128xf32> to vector<32x128xf32>
    %77 = arith.addf %75, %76 : vector<32x128xf32>
    %cst_82 = arith.constant 0.000000e+00 : f32
    %78 = vector.broadcast %cst_82 : f32 to vector<32x128xf32>
    %79 = arith.maximumf %77, %78 : vector<32x128xf32>
    %80 = vector.shape_cast %79 : vector<32x128xf32> to vector<2x16x128xf32>
    %c0_83 = arith.constant 0 : index
    %c0_84 = arith.constant 0 : index
    %c0_85 = arith.constant 0 : index
    %81 = vector.load %arg4[%c0_83, %c0_84, %c0_85] : memref<2x16x128xf32, #tpu.memory_space<vmem>>, vector<2x16x128xf32>
    tpu.vector_store %arg4[%c0_83, %c0_84, %c0_85], %80 {strides = array<i32>} : memref<2x16x128xf32, #tpu.memory_space<vmem>>, vector<2x16x128xf32>,
    return
  }
  func.func @transform_0(%arg0: i32) -> (i32, i32, i32) {
    %c0_i32 = arith.constant 0 : i32
    %c0_i32_0 = arith.constant 0 : i32
    %c0_i32_1 = arith.constant 0 : i32
    return %arg0, %c0_i32, %c0_i32_0 : i32, i32, i32
  }
  func.func @transform_1(%arg0: i32) -> (i32, i32, i32) {
    %c0_i32 = arith.constant 0 : i32
    %c0_i32_0 = arith.constant 0 : i32
    %c0_i32_1 = arith.constant 0 : i32
    %c0_i32_2 = arith.constant 0 : i32
    return %c0_i32, %c0_i32_0, %c0_i32_1 : i32, i32, i32
  }
  func.func @transform_2(%arg0: i32) -> (i32, i32) {
    %c0_i32 = arith.constant 0 : i32
    %c0_i32_0 = arith.constant 0 : i32
    %c0_i32_1 = arith.constant 0 : i32
    return %c0_i32, %c0_i32_0 : i32, i32
  }
  func.func @transform_3(%arg0: i32) -> (i32, i32, i32) {
    %c0_i32 = arith.constant 0 : i32
    %c0_i32_0 = arith.constant 0 : i32
    %c0_i32_1 = arith.constant 0 : i32
    return %arg0, %c0_i32, %c0_i32_0 : i32, i32, i32
  }
}

</mosaic_0001>

<llo_original>
// kernel: tpu_custom_call.1
$region0: #{tpu_custom_call.1}
  #allocation0 [shape = 'u32[]', space=smem, size = 0x4, offset = 0x4, fixed_abs, tag = 'smem constant byte address 0x4 - core index']
  #allocation1 [shape = 'u32[144,128]{1,0:T(1,128)}', space=vmem, size = 0x12000, scoped, tag = 'internal scratch']
  #allocation2 [shape = 'bf16[2,18,128]{2,1,0:T(8,128)(2,1)}', space=vmem, size = 0x3000, scoped, tag = 'scratch operand']
  %s0 = inlined_call_operand.hbm [shape: bf16[4,16,128], index: 0, kind: input, shape index: {}]
  %s1 = inlined_call_operand.hbm [shape: bf16[3,128,128], index: 1, kind: input, shape index: {}]
  %s2 = inlined_call_operand.vmem [shape: f32[1,128], index: 2, kind: input, shape index: {}]
  %s3 = inlined_call_operand.hbm [shape: f32[4,16,128], index: 3, kind: output, shape index: {}]
  %s4 = sld [smem:[#allocation0]]
  $region53: #{tpu_custom_call.1} parent=0
    _
  %s6 = ssub.s32 1, %s4
  %s7 = scalar_select 0, %s6, %s4
  $region1: #{tpu_custom_call.1} parent=0
    #allocation3 [shape = 'u8[16384]{0}', space=vmem, size = 0x4000, scoped, tag = 'input window, operand 0']
    #allocation4 [shape = 's32[2]{0}', space=sflag, size = 0x8, scoped, tag = 'scoped memory for tpu_custom_call.1']
    #allocation5 [shape = 's32[2]{0}', space=sflag, size = 0x8, scoped, tag = 'scoped memory for tpu_custom_call.1']
    #allocation6 [shape = 'u8[98304]{0}', space=vmem, size = 0x18000, scoped, tag = 'input window, operand 1, single buffered']
    #allocation7 [shape = 's32[1]{0}', space=sflag, size = 0x4, scoped, tag = 'scoped memory for tpu_custom_call.1']
    #allocation8 [shape = 'u8[32768]{0}', space=vmem, size = 0x8000, scoped, tag = 'output window, operand 0']
    %8 = vsyncpa [#allocation4], 0
    %s9 = scalar_lea.sflag [#allocation4], 1
    %10 = vsyncpa %s9, 0
    %11 = vsyncpa [#allocation7], 0
    %12 = vsyncpa [#allocation5], 0
    %s13 = scalar_lea.sflag [#allocation5], 1
    %14 = vsyncpa %s13, 0
    loop: start=0, step=1, limit=4
    $region2: #{tpu_custom_call.1} parent=1 // loop_pre_header
      _
    $region3: #{tpu_custom_call.1} parent=1 // loop_header
      %s16 = sphi 0, %s20
      %p17 = scmp.ge.s32.totalorder %s16, 4
      %s26 = sphi 0, %s28
      %s29 = sphi 0, %s26
      %s30 = sphi 0, %s29
      %s46 = sphi 0, %s30
      %s50 = sphi 0, %s50
      %s52 = sphi 0, %s50
      %s53 = sphi 0, %s52
      %s67 = sphi 0, %s53
      %s71 = sphi 0, %s71
      %s73 = sphi 0, %s71
      %s74 = sphi 0, %s73
      %s88 = sphi 0, %s74
      %s94 = sphi 0, %s96
      %s97 = sphi 0, %s94
      %s98 = sphi 0, %s97
      %s114 = sphi 0, %s98
    $region4: #{tpu_custom_call.1} parent=1 // loop_header_branch
      %19 = sbr.rel (%p17) target = $region8
    $region5: #{tpu_custom_call.1} parent=1 // loop_body
      %s21 = ssub.s32 %s16, 1
      %s22 = ssub.s32 %s16, 2
      %s23 = sadd.s32 %s16, 1
      %s24 = ssub.s32 %s16, %s23
      %p25 = scmp.eq.s32.totalorder %s24, 0
      %s27 = sadd.s32 %s26, 1
      %s28 = scalar_select %p25, %s26, %s27
      %p31 = pneg %p25
      %p32 = scmp.eq.s32.totalorder %s16, 1
      %p33 = por %p31, %p32
      %p34 = scmp.ne.s32.totalorder %s26, %s29
      %p35 = scmp.eq.s32.totalorder %s16, 0
      %p36 = por %p34, %p35
      %p37 = scmp.ne.s32.totalorder %s26, %s29
      %p38 = scmp.eq.s32.totalorder %s21, 1
      %p39 = por %p37, %p38
      %p40 = scmp.ne.s32.totalorder %s29, %s30
      %p41 = scmp.eq.s32.totalorder %s21, 0
      %p42 = por %p40, %p41
      %p43 = scmp.ne.s32.totalorder %s29, %s30
      %p44 = scmp.eq.s32.totalorder %s22, 1
      %p45 = por %p43, %p44
      %p47 = scmp.ne.s32.totalorder %s30, %s46
      %p48 = scmp.eq.s32.totalorder %s22, 0
      %p49 = por %p47, %p48
      %s51 = sadd.s32 %s50, 1
      %p54 = scmp.eq.s32.totalorder %s16, 1
      %p55 = scmp.ne.s32.totalorder %s50, %s52
      %p56 = scmp.eq.s32.totalorder %s16, 0
      %p57 = por %p55, %p56
      %p58 = scmp.ne.s32.totalorder %s50, %s52
      %p59 = scmp.eq.s32.totalorder %s21, 1
      %p60 = por %p58, %p59
      %p61 = scmp.ne.s32.totalorder %s52, %s53
      %p62 = scmp.eq.s32.totalorder %s21, 0
      %p63 = por %p61, %p62
      %p64 = scmp.ne.s32.totalorder %s52, %s53
      %p65 = scmp.eq.s32.totalorder %s22, 1
      %p66 = por %p64, %p65
      %p68 = scmp.ne.s32.totalorder %s53, %s67
      %p69 = scmp.eq.s32.totalorder %s22, 0
      %p70 = por %p68, %p69
      %s72 = sadd.s32 %s71, 1
      %p75 = scmp.eq.s32.totalorder %s16, 1
      %p76 = scmp.ne.s32.totalorder %s71, %s73
      %p77 = scmp.eq.s32.totalorder %s16, 0
      %p78 = por %p76, %p77
      %p79 = scmp.ne.s32.totalorder %s71, %s73
      %p80 = scmp.eq.s32.totalorder %s21, 1
      %p81 = por %p79, %p80
      %p82 = scmp.ne.s32.totalorder %s73, %s74
      %p83 = scmp.eq.s32.totalorder %s21, 0
      %p84 = por %p82, %p83
      %p85 = scmp.ne.s32.totalorder %s73, %s74
      %p86 = scmp.eq.s32.totalorder %s22, 1
      %p87 = por %p85, %p86
      %p89 = scmp.ne.s32.totalorder %s74, %s88
      %p90 = scmp.eq.s32.totalorder %s22, 0
      %p91 = por %p89, %p90
      %s92 = ssub.s32 %s16, %s23
      %p93 = scmp.eq.s32.totalorder %s92, 0
      %s95 = sadd.s32 %s94, 1
      %s96 = scalar_select %p93, %s94, %s95
      %p99 = pneg %p93
      %p100 = scmp.eq.s32.totalorder %s16, 1
      %p101 = por %p99, %p100
      %p102 = scmp.ne.s32.totalorder %s94, %s97
      %p103 = scmp.eq.s32.totalorder %s16, 0
      %p104 = por %p102, %p103
      %p105 = scmp.ne.s32.totalorder %s94, %s97
      %p106 = scmp.eq.s32.totalorder %s21, 1
      %p107 = por %p105, %p106
      %p108 = scmp.ne.s32.totalorder %s97, %s98
      %p109 = scmp.eq.s32.totalorder %s21, 0
      %p110 = por %p108, %p109
      %p111 = scmp.ne.s32.totalorder %s97, %s98
      %p112 = scmp.eq.s32.totalorder %s22, 1
      %p113 = por %p111, %p112
      %p115 = scmp.ne.s32.totalorder %s98, %s114
      %p116 = scmp.eq.s32.totalorder %s22, 0
      %p117 = por %p115, %p116
      %p118 = scmp.le.s32.totalorder 1, %s16
      %p119 = scmp.lt.s32.totalorder %s16, 3
      %p120 = pnand %p118, %p119
      %p121 = pneg %p120
      // Predicated region
      $region9: #{tpu_custom_call.1} parent=5 // pred_check
        _
      $region10: #{tpu_custom_call.1} parent=5 // pred_check_branch
        %123 = sbr.rel (%p120) target = $region12
      $region11: #{tpu_custom_call.1} parent=5 // pred_region
        %s124 = ssub.s32 %s16, 1
        // Predicated region
        $region13: #{tpu_custom_call.1} parent=11 // pred_check
          %p125 = pneg %p63
        $region14: #{tpu_custom_call.1} parent=11 // pred_check_branch
          %127 = sbr.rel (%p125) target = $region16
        $region15: #{tpu_custom_call.1} parent=11 // pred_region
          %s129 = ssub.s32 3072, 3072
          %130 = vsyncadd [#allocation7], %s129
          %s131 = sshll.u32 [#allocation6], 4
          %s132 = int_to_ptr.vmem [resolvable:$true] %s131
          %137 = dma.hbm_to_vmem [thread:$0]  %s1, 3072, %s132, [#allocation7], 64, 64, 4
        $region16: #{tpu_custom_call.1} parent=11 // pred_fallthru
          _
        // Predicated region
        $region17: #{tpu_custom_call.1} parent=11 // pred_check
          %p138 = pneg %p84
        $region18: #{tpu_custom_call.1} parent=11 // pred_check_branch
          %140 = sbr.rel (%p138) target = $region20
        $region19: #{tpu_custom_call.1} parent=11 // pred_region
          _
        $region20: #{tpu_custom_call.1} parent=11 // pred_fallthru
          _
      $region12: #{tpu_custom_call.1} parent=5 // pred_fallthru
        _
      %p141 = scmp.lt.s32.totalorder %s16, 2
      // Predicated region
      $region21: #{tpu_custom_call.1} parent=5 // pred_check
        %p142 = pneg %p141
      $region22: #{tpu_custom_call.1} parent=5 // pred_check_branch
        %144 = sbr.rel (%p142) target = $region24
      $region23: #{tpu_custom_call.1} parent=5 // pred_region
        // Predicated region
        $region25: #{tpu_custom_call.1} parent=23 // pred_check
          %p145 = pneg %p36
        $region26: #{tpu_custom_call.1} parent=23 // pred_check_branch
          %147 = sbr.rel (%p145) target = $region28
        $region27: #{tpu_custom_call.1} parent=23 // pred_region
          %s148 = sand.u32 %s26, 1
          %s149 = scalar_lea.sflag [#allocation4], %s148
          %s150 = sand.u32 %s26, 1
          %s151 = smul.addr %s150, 16
          %s152 = scalar_lea.vmem [#allocation3], %s151
          %s153 = smul.u32 2, %s16
          %s155 = ssub.s32 256, 256
          %156 = vsyncadd %s149, %s155
          %s157 = smul.addr %s153, 2
          %s158 = smul.addr %s157, 64
          %s159 = scalar_lea.hbm %s0, %s158
          %s160 = sshll.u32 %s152, 4
          %s161 = int_to_ptr.vmem [resolvable:$true] %s160
          %166 = dma.hbm_to_vmem [thread:$0]  %s159, 256, %s161, %s149, 64, 64, 4
        $region28: #{tpu_custom_call.1} parent=23 // pred_fallthru
          _
      $region24: #{tpu_custom_call.1} parent=5 // pred_fallthru
        _
      %p167 = scmp.le.s32.totalorder 1, %s16
      %p168 = scmp.lt.s32.totalorder %s16, 3
      %p169 = pnand %p167, %p168
      %p170 = pneg %p169
      // Predicated region
      $region29: #{tpu_custom_call.1} parent=5 // pred_check
        _
      $region30: #{tpu_custom_call.1} parent=5 // pred_check_branch
        %172 = sbr.rel (%p169) target = $region32
      $region31: #{tpu_custom_call.1} parent=5 // pred_region
        %s173 = ssub.s32 %s16, 1
        %s174 = sand.u32 %s29, 1
        %s175 = scalar_lea.sflag [#allocation4], %s174
        %s176 = sand.u32 %s29, 1
        %s177 = smul.addr %s176, 16
        %s178 = scalar_lea.vmem [#allocation3], %s177
        // Predicated region
        $region33: #{tpu_custom_call.1} parent=31 // pred_check
          %p179 = pneg %p42
        $region34: #{tpu_custom_call.1} parent=31 // pred_check_branch
          %181 = sbr.rel (%p179) target = $region36
        $region35: #{tpu_custom_call.1} parent=31 // pred_region
          %182 = dma.done %s175, 256
        $region36: #{tpu_custom_call.1} parent=31 // pred_fallthru
          _
        // Predicated region
        $region37: #{tpu_custom_call.1} parent=31 // pred_check
          %p183 = pneg %p63
        $region38: #{tpu_custom_call.1} parent=31 // pred_check_branch
          %185 = sbr.rel (%p183) target = $region40
        $region39: #{tpu_custom_call.1} parent=31 // pred_region
          %186 = dma.done [#allocation7], 3072
        $region40: #{tpu_custom_call.1} parent=31 // pred_fallthru
          _
        %s187 = sand.u32 %s29, 1
        %s188 = scalar_lea.sflag [#allocation4], %s187
        %s189 = sand.u32 %s29, 1
        %s190 = smul.addr %s189, 16
        %s191 = scalar_lea.vmem [#allocation3], %s190
        %p192 = pneg %p42
        %p193 = pneg %p39
        %p194 = pneg %p63
        %p195 = pneg %p60
        %p196 = pneg %p84
        %p197 = pneg %p81
        %p198 = pneg %p110
        %p199 = pneg %p107
        %s200 = sand.u32 %s97, 1
        %s201 = scalar_lea.sflag [#allocation5], %s200
        %s202 = sand.u32 %s97, 1
        %s203 = smul.addr %s202, 32
        %s204 = scalar_lea.vmem [#allocation8], %s203
        %s205 = smul.u32 2, %s21
        %s206 = smul.u32 2, %s21
        %vm208 = vcmask 1040384
        %vm209 = vsmask.f32 256
        %vm210 = vmand %vm208, %vm209
        %v211 = vld [vmem:[#allocation2] sm:$0x1]
        %v212 = vsel %vm210, 0, %v211
        %213 = vst [vmem:[#allocation2] sm:$0x1] %v212
        %v214 = vld [vmem:[#allocation2 + $0xc] sm:$0x1]
        %v215 = vsel %vm210, 0, %v214
        %216 = vst [vmem:[#allocation2 + $0xc] sm:$0x1] %v215
        %vm217 = vsmask.f32 7938
        %vm218 = vmand %vm208, %vm217
        %v219 = vld [vmem:[#allocation2 + $0x8] sm:$0x1]
        %v220 = vsel %vm218, 0, %v219
        %221 = vst [vmem:[#allocation2 + $0x8] sm:$0x1] %v220
        %v222 = vld [vmem:[#allocation2 + $0x14] sm:$0x1]
        %v223 = vsel %vm218, 0, %v222
        %224 = vst [vmem:[#allocation2 + $0x14] sm:$0x1] %v223
        %v225 = vld [vmem:[%s2] sm:$0x1]
        %v226 = vld [vmem:[%s178] sm:$0xf]
        %v227 = vld [vmem:[%s178 + $0x4] sm:$0xf]
        %v228 = vld [vmem:[%s178 + $0x8] sm:$0xf]
        %v229 = vld [vmem:[%s178 + $0xc] sm:$0xf]
        %v230 = vunpack.c.l.bf16 %v226
        %v231 = vunpack.c.l.bf16 %v227
        %v232 = vunpack.c.l.bf16 %v228
        %v233 = vunpack.c.l.bf16 %v229
        %vm234 = vsmask.f32 4368
        %vm235 = vmor %vm209, %vm234
        %v237 = vshrl.u32 %v226, 16
        %v239 = vrot.slane %v237, 7
        %v240 = vshll.u32 %v226, 16
        %v242 = vor.u32 %v239, %v240
        %v243 = vrot.slane %v239, 4
        %v245 = vshrl.u32 %v227, 16
        %v247 = vrot.slane %v245, 7
        %v248 = vshll.u32 %v227, 16
        %v250 = vor.u32 %v247, %v248
        %v251 = vsel %vm235, %v243, %v250
        %v252 = vrot.slane %v247, 4
        %v254 = vshrl.u32 %v228, 16
        %v256 = vrot.slane %v254, 7
        %v257 = vshll.u32 %v228, 16
        %v259 = vor.u32 %v256, %v257
        %v260 = vrot.slane %v256, 4
        %v262 = vshrl.u32 %v229, 16
        %v264 = vrot.slane %v262, 7
        %v265 = vshll.u32 %v229, 16
        %v267 = vor.u32 %v264, %v265
        %v268 = vsel %vm235, %v260, %v267
        %v269 = vrot.slane %v264, 4
        %vm276 = vcmask 1043456
        %vm277 = vmand %vm276, %vm217
        %v278 = vld [vmem:[#allocation2] sm:$0xf]
        %v279 = vsel %vm277, %v242, %v278
        %280 = vst [vmem:[#allocation2] sm:$0xf] %v279
        %281 = vst [vmem:[#allocation2 + $0x4] sm:$0xf] %v251
        %v282 = vld [vmem:[#allocation2 + $0x8] sm:$0x1]
        %v283 = vsel %vm210, %v252, %v282
        %284 = vst [vmem:[#allocation2 + $0x8] sm:$0x1] %v283
        %v285 = vld [vmem:[#allocation2 + $0xc] sm:$0xf]
        %v286 = vsel %vm277, %v259, %v285
        %287 = vst [vmem:[#allocation2 + $0xc] sm:$0xf] %v286
        %288 = vst [vmem:[#allocation2 + $0x10] sm:$0xf] %v268
        %v289 = vld [vmem:[#allocation2 + $0x14] sm:$0x1]
        %v290 = vsel %vm210, %v269, %v289
        %291 = vst [vmem:[#allocation2 + $0x14] sm:$0x1] %v290
        %v292 = vld [vmem:[#allocation2] sm:$0xf]
        %v293 = vld [vmem:[#allocation2 + $0x4] sm:$0xf]
        %v294 = vld [vmem:[#allocation2 + $0xc] sm:$0xf]
        %v295 = vld [vmem:[#allocation2 + $0x10] sm:$0xf]
        %v296 = vld [vmem:[#allocation6] sm:$0xf]
        %v297 = vld [vmem:[#allocation6 + $0x4] sm:$0xf]
        %v298 = vld [vmem:[#allocation6 + $0x8] sm:$0xf]
        %v299 = vld [vmem:[#allocation6 + $0xc] sm:$0xf]
        %v300 = vld [vmem:[#allocation6 + $0x10] sm:$0xf]
        %v301 = vld [vmem:[#allocation6 + $0x14] sm:$0xf]
        %v302 = vld [vmem:[#allocation6 + $0x18] sm:$0xf]
        %v303 = vld [vmem:[#allocation6 + $0x1c] sm:$0xf]
        %v304 = vld [vmem:[#allocation6 + $0x20] sm:$0xf]
        %v305 = vld [vmem:[#allocation6 + $0x24] sm:$0xf]
        %v306 = vld [vmem:[#allocation6 + $0x28] sm:$0xf]
        %v307 = vld [vmem:[#allocation6 + $0x2c] sm:$0xf]
        %v308 = vld [vmem:[#allocation6 + $0x30] sm:$0xf]
        %v309 = vld [vmem:[#allocation6 + $0x34] sm:$0xf]
        %v310 = vld [vmem:[#allocation6 + $0x38] sm:$0xf]
        %v311 = vld [vmem:[#allocation6 + $0x3c] sm:$0xf]
        %v312 = vld [vmem:[#allocation2 + $0x8] sm:$0x1]
        %v313 = vld [vmem:[#allocation2 + $0x14] sm:$0x1]
        %vm314 = vsmask.f32 3328
        %vm315 = vsmask.f32 7440
        %vm316 = vmor %vm314, %vm315
        %v318 = vshrl.u32 %v292, 16
        %v320 = vrot.slane %v318, 4
        %v321 = vshll.u32 %v292, 16
        %v323 = vrot.slane %v321, 5
        %v324 = vor.u32 %v320, %v323
        %v325 = vrot.slane %v324, 4
        %v327 = vshll.u32 %v293, 16
        %v329 = vrot.slane %v327, 5
        %v330 = vsel %vm316, %v325, %v329
        %v331 = vshrl.u32 %v293, 16
        %v333 = vrot.slane %v331, 4
        %v334 = vor.u32 %v333, %v329
        %v335 = vrot.slane %v334, 4
        %v337 = vshll.u32 %v312, 16
        %v339 = vrot.slane %v337, 5
        %v340 = vsel %vm316, %v335, %v339
        %v342 = vshrl.u32 %v294, 16
        %v344 = vrot.slane %v342, 4
        %v345 = vshll.u32 %v294, 16
        %v347 = vrot.slane %v345, 5
        %v348 = vor.u32 %v344, %v347
        %v349 = vrot.slane %v348, 4
        %v351 = vshll.u32 %v295, 16
        %v353 = vrot.slane %v351, 5
        %v354 = vsel %vm316, %v349, %v353
        %v355 = vshrl.u32 %v295, 16
        %v357 = vrot.slane %v355, 4
        %v358 = vor.u32 %v357, %v353
        %v359 = vrot.slane %v358, 4
        %v361 = vshll.u32 %v313, 16
        %v363 = vrot.slane %v361, 5
        %v364 = vsel %vm316, %v359, %v363
        %s365 = scalar_lea.vmem [#allocation6], 64
        %v366 = vld [vmem:[%s365] sm:$0xf]
        %v367 = vld [vmem:[%s365 + $0x4] sm:$0xf]
        %v368 = vld [vmem:[%s365 + $0x8] sm:$0xf]
        %v369 = vld [vmem:[%s365 + $0xc] sm:$0xf]
        %v370 = vld [vmem:[%s365 + $0x10] sm:$0xf]
        %v371 = vld [vmem:[%s365 + $0x14] sm:$0xf]
        %v372 = vld [vmem:[%s365 + $0x18] sm:$0xf]
        %v373 = vld [vmem:[%s365 + $0x1c] sm:$0xf]
        %v374 = vld [vmem:[%s365 + $0x20] sm:$0xf]
        %v375 = vld [vmem:[%s365 + $0x24] sm:$0xf]
        %v376 = vld [vmem:[%s365 + $0x28] sm:$0xf]
        %v377 = vld [vmem:[%s365 + $0x2c] sm:$0xf]
        %v378 = vld [vmem:[%s365 + $0x30] sm:$0xf]
        %v379 = vld [vmem:[%s365 + $0x34] sm:$0xf]
        %v380 = vld [vmem:[%s365 + $0x38] sm:$0xf]
        %v381 = vld [vmem:[%s365 + $0x3c] sm:$0xf]
        %v382 = vunpack.c.l.b16 %v330
        %v383 = vunpack.c.l.b16 %v340
        %v384 = vunpack.c.l.b16 %v354
        %v385 = vunpack.c.l.b16 %v364
        %v386 = vpack.c.b16 %v383, %v382
        %v387 = vpack.c.b16 %v385, %v384
        %v406 = vunpack.c.l.b16 %v366
        %v407 = vunpack.c.l.b16 %v367
        %v408 = vunpack.c.l.b16 %v368
        %v409 = vunpack.c.l.b16 %v369
        %v410 = vunpack.c.l.b16 %v370
        %v411 = vunpack.c.l.b16 %v371
        %v412 = vunpack.c.l.b16 %v372
        %v413 = vunpack.c.l.b16 %v373
        %v414 = vunpack.c.l.b16 %v374
        %v415 = vunpack.c.l.b16 %v375
        %v416 = vunpack.c.l.b16 %v376
        %v417 = vunpack.c.l.b16 %v377
        %v418 = vunpack.c.l.b16 %v378
        %v419 = vunpack.c.l.b16 %v379
        %v420 = vunpack.c.l.b16 %v380
        %v421 = vunpack.c.l.b16 %v381
        %v422 = vpack.c.b16 %v407, %v406
        %v423 = vpack.c.b16 %v409, %v408
        %v424 = vpack.c.b16 %v411, %v410
        %v425 = vpack.c.b16 %v413, %v412
        %v426 = vpack.c.b16 %v415, %v414
        %v427 = vpack.c.b16 %v417, %v416
        %v428 = vpack.c.b16 %v419, %v418
        %v429 = vpack.c.b16 %v421, %v420
        %438 = vmatprep.subr.bf16.mxu0 0
        %439 = vmatpush1.bf16.msra.mxu0 %v429
        %440 = vmatprep.subr.bf16.mxu0 0
        %441 = vmatpush1.bf16.msra.mxu0 %v428
        %442 = vmatprep.subr.bf16.mxu0 0
        %443 = vmatpush1.bf16.msra.mxu0 %v427
        %444 = vmatprep.subr.bf16.mxu0 0
        %445 = vmatpush1.bf16.msra.mxu0 %v426
        %446 = vmatprep.subr.bf16.mxu0 0
        %447 = vmatpush1.bf16.msra.mxu0 %v425
        %448 = vmatprep.subr.bf16.mxu0 0
        %449 = vmatpush1.bf16.msra.mxu0 %v424
        %450 = vmatprep.subr.bf16.mxu0 0
        %451 = vmatpush1.bf16.msra.mxu0 %v423
        %452 = vmatprep.subr.bf16.mxu0 0
        %453 = vmatpush1.bf16.msra.mxu0 %v422
        %454 = vmatprep.subr.bf16.mxu0 0
        %455 = vmatpush2.bf16.msra.mxu0 0
        %456 = vmatprep.subr.bf16.mxu0 0
        %457 = vmatpush2.bf16.msra.mxu0 0
        %458 = vmatprep.subr.bf16.mxu0 0
        %459 = vmatpush2.bf16.msra.mxu0 0
        %460 = vmatprep.subr.bf16.mxu0 0
        %461 = vmatpush2.bf16.msra.mxu0 0
        %462 = vmatprep.subr.bf16.mxu0 0
        %463 = vmatpush2.bf16.msra.mxu0 0
        %464 = vmatprep.subr.bf16.mxu0 0
        %465 = vmatpush2.bf16.msra.mxu0 0
        %466 = vmatprep.subr.bf16.mxu0 0
        %467 = vmatpush2.bf16.msra.mxu0 0
        %468 = vmatprep.subr.bf16.mxu0 0
        %469 = vmatpush2.bf16.msra.mxu0 0
        %470 = vmatprep.mubr.bf16.mxu0 0
        %471 = vmatmul.mubr.bf16.gmra.mxu0 %v386
        %v472 = vpop.f32.mrf.mxu0
        %v473 = vadd.f32 0.0, %v472
        %v474 = vpop.f32.mrf.mxu0
        %v475 = vpop.f32.mrf.mxu0
        %v476 = vadd.f32 0.0, %v475
        %v477 = vpop.f32.mrf.mxu0
        %478 = vmatprep.mubr.bf16.mxu0 0
        %479 = vmatmul.mubr.bf16.gmra.mxu0 %v387
        %v480 = vpop.f32.mrf.mxu0
        %v481 = vadd.f32 0.0, %v480
        %v482 = vpop.f32.mrf.mxu0
        %v483 = vpop.f32.mrf.mxu0
        %v484 = vadd.f32 0.0, %v483
        %v485 = vpop.f32.mrf.mxu0
        %486 = vdwg.mxu0
        %v491 = vunpack.c.l.b16 %v292
        %v492 = vunpack.c.l.b16 %v293
        %v493 = vunpack.c.l.b16 %v294
        %v494 = vunpack.c.l.b16 %v295
        %v495 = vpack.c.b16 %v492, %v491
        %v496 = vpack.c.b16 %v494, %v493
        %v515 = vunpack.c.l.b16 %v296
        %v516 = vunpack.c.l.b16 %v297
        %v517 = vunpack.c.l.b16 %v298
        %v518 = vunpack.c.l.b16 %v299
        %v519 = vunpack.c.l.b16 %v300
        %v520 = vunpack.c.l.b16 %v301
        %v521 = vunpack.c.l.b16 %v302
        %v522 = vunpack.c.l.b16 %v303
        %v523 = vunpack.c.l.b16 %v304
        %v524 = vunpack.c.l.b16 %v305
        %v525 = vunpack.c.l.b16 %v306
        %v526 = vunpack.c.l.b16 %v307
        %v527 = vunpack.c.l.b16 %v308
        %v528 = vunpack.c.l.b16 %v309
        %v529 = vunpack.c.l.b16 %v310
        %v530 = vunpack.c.l.b16 %v311
        %v531 = vpack.c.b16 %v516, %v515
        %v532 = vpack.c.b16 %v518, %v517
        %v533 = vpack.c.b16 %v520, %v519
        %v534 = vpack.c.b16 %v522, %v521
        %v535 = vpack.c.b16 %v524, %v523
        %v536 = vpack.c.b16 %v526, %v525
        %v537 = vpack.c.b16 %v528, %v527
        %v538 = vpack.c.b16 %v530, %v529
        %547 = vmatprep.subr.bf16.mxu0 0
        %548 = vmatpush1.bf16.msra.mxu0 %v538
        %549 = vmatprep.subr.bf16.mxu0 0
        %550 = vmatpush1.bf16.msra.mxu0 %v537
        %551 = vmatprep.subr.bf16.mxu0 0
        %552 = vmatpush1.bf16.msra.mxu0 %v536
        %553 = vmatprep.subr.bf16.mxu0 0
        %554 = vmatpush1.bf16.msra.mxu0 %v535
        %555 = vmatprep.subr.bf16.mxu0 0
        %556 = vmatpush1.bf16.msra.mxu0 %v534
        %557 = vmatprep.subr.bf16.mxu0 0
        %558 = vmatpush1.bf16.msra.mxu0 %v533
        %559 = vmatprep.subr.bf16.mxu0 0
        %560 = vmatpush1.bf16.msra.mxu0 %v532
        %561 = vmatprep.subr.bf16.mxu0 0
        %562 = vmatpush1.bf16.msra.mxu0 %v531
        %563 = vmatprep.subr.bf16.mxu0 0
        %564 = vmatpush2.bf16.msra.mxu0 0
        %565 = vmatprep.subr.bf16.mxu0 0
        %566 = vmatpush2.bf16.msra.mxu0 0
        %567 = vmatprep.subr.bf16.mxu0 0
        %568 = vmatpush2.bf16.msra.mxu0 0
        %569 = vmatprep.subr.bf16.mxu0 0
        %570 = vmatpush2.bf16.msra.mxu0 0
        %571 = vmatprep.subr.bf16.mxu0 0
        %572 = vmatpush2.bf16.msra.mxu0 0
        %573 = vmatprep.subr.bf16.mxu0 0
        %574 = vmatpush2.bf16.msra.mxu0 0
        %575 = vmatprep.subr.bf16.mxu0 0
        %576 = vmatpush2.bf16.msra.mxu0 0
        %577 = vmatprep.subr.bf16.mxu0 0
        %578 = vmatpush2.bf16.msra.mxu0 0
        %579 = vmatprep.mubr.bf16.mxu0 0
        %580 = vmatmul.mubr.bf16.gmra.mxu0 %v495
        %v581 = vpop.f32.mrf.mxu0
        %v582 = vadd.f32 %v473, %v581
        %v583 = vpop.f32.mrf.mxu0
        %v584 = vpop.f32.mrf.mxu0
        %v585 = vadd.f32 %v476, %v584
        %v586 = vpop.f32.mrf.mxu0
        %587 = vmatprep.mubr.bf16.mxu0 0
        %588 = vmatmul.mubr.bf16.gmra.mxu0 %v496
        %v589 = vpop.f32.mrf.mxu0
        %v590 = vadd.f32 %v481, %v589
        %v591 = vpop.f32.mrf.mxu0
        %v592 = vpop.f32.mrf.mxu0
        %v593 = vadd.f32 %v484, %v592
        %v594 = vpop.f32.mrf.mxu0
        %595 = vdwg.mxu0
        %v596 = vld [vmem:[#allocation2] sm:$0xe]
        %v597 = vld [vmem:[#allocation2 + $0xc] sm:$0xe]
        %vm602 = vcmask 1042432
        %vm603 = vcmask 1046532
        %vm604 = vmor %vm602, %vm603
        %v605 = vrot.slane %v596, 5
        %v606 = vrot.slane %v605, 4
        %v607 = vrot.slane %v293, 5
        %v608 = vsel %vm604, %v606, %v607
        %v609 = vrot.slane %v607, 4
        %v610 = vrot.slane %v312, 5
        %v611 = vsel %vm604, %v609, %v610
        %v612 = vrot.slane %v597, 5
        %v613 = vrot.slane %v612, 4
        %v614 = vrot.slane %v295, 5
        %v615 = vsel %vm604, %v613, %v614
        %v616 = vrot.slane %v614, 4
        %v617 = vrot.slane %v313, 5
        %v618 = vsel %vm604, %v616, %v617
        %s619 = scalar_lea.vmem [#allocation6], 128
        %v620 = vld [vmem:[%s619] sm:$0xf]
        %v621 = vld [vmem:[%s619 + $0x4] sm:$0xf]
        %v622 = vld [vmem:[%s619 + $0x8] sm:$0xf]
        %v623 = vld [vmem:[%s619 + $0xc] sm:$0xf]
        %v624 = vld [vmem:[%s619 + $0x10] sm:$0xf]
        %v625 = vld [vmem:[%s619 + $0x14] sm:$0xf]
        %v626 = vld [vmem:[%s619 + $0x18] sm:$0xf]
        %v627 = vld [vmem:[%s619 + $0x1c] sm:$0xf]
        %v628 = vld [vmem:[%s619 + $0x20] sm:$0xf]
        %v629 = vld [vmem:[%s619 + $0x24] sm:$0xf]
        %v630 = vld [vmem:[%s619 + $0x28] sm:$0xf]
        %v631 = vld [vmem:[%s619 + $0x2c] sm:$0xf]
        %v632 = vld [vmem:[%s619 + $0x30] sm:$0xf]
        %v633 = vld [vmem:[%s619 + $0x34] sm:$0xf]
        %v634 = vld [vmem:[%s619 + $0x38] sm:$0xf]
        %v635 = vld [vmem:[%s619 + $0x3c] sm:$0xf]
        %v636 = vunpack.c.l.b16 %v608
        %v637 = vunpack.c.l.b16 %v611
        %v638 = vunpack.c.l.b16 %v615
        %v639 = vunpack.c.l.b16 %v618
        %v640 = vpack.c.b16 %v637, %v636
        %v641 = vpack.c.b16 %v639, %v638
        %v660 = vunpack.c.l.b16 %v620
        %v661 = vunpack.c.l.b16 %v621
        %v662 = vunpack.c.l.b16 %v622
        %v663 = vunpack.c.l.b16 %v623
        %v664 = vunpack.c.l.b16 %v624
        %v665 = vunpack.c.l.b16 %v625
        %v666 = vunpack.c.l.b16 %v626
        %v667 = vunpack.c.l.b16 %v627
        %v668 = vunpack.c.l.b16 %v628
        %v669 = vunpack.c.l.b16 %v629
        %v670 = vunpack.c.l.b16 %v630
        %v671 = vunpack.c.l.b16 %v631
        %v672 = vunpack.c.l.b16 %v632
        %v673 = vunpack.c.l.b16 %v633
        %v674 = vunpack.c.l.b16 %v634
        %v675 = vunpack.c.l.b16 %v635
        %v676 = vpack.c.b16 %v661, %v660
        %v677 = vpack.c.b16 %v663, %v662
        %v678 = vpack.c.b16 %v665, %v664
        %v679 = vpack.c.b16 %v667, %v666
        %v680 = vpack.c.b16 %v669, %v668
        %v681 = vpack.c.b16 %v671, %v670
        %v682 = vpack.c.b16 %v673, %v672
        %v683 = vpack.c.b16 %v675, %v674
        %692 = vmatprep.subr.bf16.mxu0 0
        %693 = vmatpush1.bf16.msra.mxu0 %v683
        %694 = vmatprep.subr.bf16.mxu0 0
        %695 = vmatpush1.bf16.msra.mxu0 %v682
        %696 = vmatprep.subr.bf16.mxu0 0
        %697 = vmatpush1.bf16.msra.mxu0 %v681
        %698 = vmatprep.subr.bf16.mxu0 0
        %699 = vmatpush1.bf16.msra.mxu0 %v680
        %700 = vmatprep.subr.bf16.mxu0 0
        %701 = vmatpush1.bf16.msra.mxu0 %v679
        %702 = vmatprep.subr.bf16.mxu0 0
        %703 = vmatpush1.bf16.msra.mxu0 %v678
        %704 = vmatprep.subr.bf16.mxu0 0
        %705 = vmatpush1.bf16.msra.mxu0 %v677
        %706 = vmatprep.subr.bf16.mxu0 0
        %707 = vmatpush1.bf16.msra.mxu0 %v676
        %708 = vmatprep.subr.bf16.mxu0 0
        %709 = vmatpush2.bf16.msra.mxu0 0
        %710 = vmatprep.subr.bf16.mxu0 0
        %711 = vmatpush2.bf16.msra.mxu0 0
        %712 = vmatprep.subr.bf16.mxu0 0
        %713 = vmatpush2.bf16.msra.mxu0 0
        %714 = vmatprep.subr.bf16.mxu0 0
        %715 = vmatpush2.bf16.msra.mxu0 0
        %716 = vmatprep.subr.bf16.mxu0 0
        %717 = vmatpush2.bf16.msra.mxu0 0
        %718 = vmatprep.subr.bf16.mxu0 0
        %719 = vmatpush2.bf16.msra.mxu0 0
        %720 = vmatprep.subr.bf16.mxu0 0
        %721 = vmatpush2.bf16.msra.mxu0 0
        %722 = vmatprep.subr.bf16.mxu0 0
        %723 = vmatpush2.bf16.msra.mxu0 0
        %724 = vmatprep.mubr.bf16.mxu0 0
        %725 = vmatmul.mubr.bf16.gmra.mxu0 %v640
        %v726 = vpop.f32.mrf.mxu0
        %v727 = vadd.f32 0.0, %v726
        %v728 = vpop.f32.mrf.mxu0
        %v729 = vpop.f32.mrf.mxu0
        %v730 = vadd.f32 0.0, %v729
        %v731 = vpop.f32.mrf.mxu0
        %732 = vmatprep.mubr.bf16.mxu0 0
        %733 = vmatmul.mubr.bf16.gmra.mxu0 %v641
        %v734 = vpop.f32.mrf.mxu0
        %v735 = vadd.f32 0.0, %v734
        %v736 = vpop.f32.mrf.mxu0
        %v737 = vpop.f32.mrf.mxu0
        %v738 = vadd.f32 0.0, %v737
        %v739 = vpop.f32.mrf.mxu0
        %740 = vdwg.mxu0
        %v741 = vadd.f32 %v582, %v727
        %v742 = vadd.f32 %v585, %v730
        %v743 = vadd.f32 %v590, %v735
        %v744 = vadd.f32 %v593, %v738
        %v746 = vlaneseq
        %v747 = vshrl.u32 %v746, 7
        %v748 = vsub.s32 0, %v747
        %v749 = vrot.slane %v225, %v748
        %v751 = vadd.f32 %v741, %v749
        %v752 = vadd.f32 %v742, %v749
        %v753 = vadd.f32 %v743, %v749
        %v754 = vadd.f32 %v744, %v749
        %v755 = vmax.f32 %v751, 0.0
        %v756 = vmax.f32 %v752, 0.0
        %v757 = vmax.f32 %v753, 0.0
        %v758 = vmax.f32 %v754, 0.0
        %v759 = vadd.f32 %v230, %v755
        %v760 = vadd.f32 %v231, %v756
        %v761 = vadd.f32 %v232, %v757
        %v762 = vadd.f32 %v233, %v758
        %v763 = vpack.c.bf16 %v760, %v759
        %v764 = vpack.c.bf16 %v762, %v761
        %v767 = vunpack.c.l.b16 %v763
        %v768 = vunpack.c.h.b16 %v763
        %v769 = vunpack.c.l.b16 %v764
        %v770 = vunpack.c.h.b16 %v764
        %v771 = vpack.c.b16 %v767, %v767
        %v772 = vpack.c.b16 %v768, %v768
        %v773 = vpack.c.b16 %v769, %v769
        %v774 = vpack.c.b16 %v770, %v770
        %v776 = vshrl.u32 %v771, 16
        %v778 = vrot.slane %v776, 7
        %v779 = vshll.u32 %v771, 16
        %v781 = vor.u32 %v778, %v779
        %v782 = vrot.slane %v778, 4
        %v784 = vshrl.u32 %v772, 16
        %v786 = vrot.slane %v784, 7
        %v787 = vshll.u32 %v772, 16
        %v789 = vor.u32 %v786, %v787
        %v790 = vsel %vm235, %v782, %v789
        %v791 = vrot.slane %v786, 4
        %v793 = vshrl.u32 %v773, 16
        %v795 = vrot.slane %v793, 7
        %v796 = vshll.u32 %v773, 16
        %v798 = vor.u32 %v795, %v796
        %v799 = vrot.slane %v795, 4
        %v801 = vshrl.u32 %v774, 16
        %v803 = vrot.slane %v801, 7
        %v804 = vshll.u32 %v774, 16
        %v806 = vor.u32 %v803, %v804
        %v807 = vsel %vm235, %v799, %v806
        %v808 = vrot.slane %v803, 4
        %v815 = vsel %vm277, %v781, %v292
        %816 = vst [vmem:[#allocation2] sm:$0xf] %v815
        %817 = vst [vmem:[#allocation2 + $0x4] sm:$0xf] %v790
        %v818 = vld [vmem:[#allocation2 + $0x8] sm:$0x1]
        %v819 = vsel %vm210, %v791, %v818
        %820 = vst [vmem:[#allocation2 + $0x8] sm:$0x1] %v819
        %v821 = vld [vmem:[#allocation2 + $0xc] sm:$0xf]
        %v822 = vsel %vm277, %v798, %v821
        %823 = vst [vmem:[#allocation2 + $0xc] sm:$0xf] %v822
        %824 = vst [vmem:[#allocation2 + $0x10] sm:$0xf] %v807
        %v825 = vld [vmem:[#allocation2 + $0x14] sm:$0x1]
        %v826 = vsel %vm210, %v808, %v825
        %827 = vst [vmem:[#allocation2 + $0x14] sm:$0x1] %v826
        %v828 = vld [vmem:[#allocation2] sm:$0xf]
        %v829 = vld [vmem:[#allocation2 + $0x4] sm:$0xf]
        %v830 = vld [vmem:[#allocation2 + $0xc] sm:$0xf]
        %v831 = vld [vmem:[#allocation2 + $0x10] sm:$0xf]
        %v832 = vld [vmem:[#allocation6] sm:$0xf]
        %v833 = vld [vmem:[#allocation6 + $0x4] sm:$0xf]
        %v834 = vld [vmem:[#allocation6 + $0x8] sm:$0xf]
        %v835 = vld [vmem:[#allocation6 + $0xc] sm:$0xf]
        %v836 = vld [vmem:[#allocation6 + $0x10] sm:$0xf]
        %v837 = vld [vmem:[#allocation6 + $0x14] sm:$0xf]
        %v838 = vld [vmem:[#allocation6 + $0x18] sm:$0xf]
        %v839 = vld [vmem:[#allocation6 + $0x1c] sm:$0xf]
        %v840 = vld [vmem:[#allocation6 + $0x20] sm:$0xf]
        %v841 = vld [vmem:[#allocation6 + $0x24] sm:$0xf]
        %v842 = vld [vmem:[#allocation6 + $0x28] sm:$0xf]
        %v843 = vld [vmem:[#allocation6 + $0x2c] sm:$0xf]
        %v844 = vld [vmem:[#allocation6 + $0x30] sm:$0xf]
        %v845 = vld [vmem:[#allocation6 + $0x34] sm:$0xf]
        %v846 = vld [vmem:[#allocation6 + $0x38] sm:$0xf]
        %v847 = vld [vmem:[#allocation6 + $0x3c] sm:$0xf]
        %v848 = vld [vmem:[#allocation2 + $0x8] sm:$0x1]
        %v849 = vld [vmem:[#allocation2 + $0x14] sm:$0x1]
        %v851 = vshrl.u32 %v828, 16
        %v853 = vrot.slane %v851, 4
        %v854 = vshll.u32 %v828, 16
        %v856 = vrot.slane %v854, 5
        %v857 = vor.u32 %v853, %v856
        %v858 = vrot.slane %v857, 4
        %v860 = vshll.u32 %v829, 16
        %v862 = vrot.slane %v860, 5
        %v863 = vsel %vm316, %v858, %v862
        %v864 = vshrl.u32 %v829, 16
        %v866 = vrot.slane %v864, 4
        %v867 = vor.u32 %v866, %v862
        %v868 = vrot.slane %v867, 4
        %v870 = vshll.u32 %v848, 16
        %v872 = vrot.slane %v870, 5
        %v873 = vsel %vm316, %v868, %v872
        %v875 = vshrl.u32 %v830, 16
        %v877 = vrot.slane %v875, 4
        %v878 = vshll.u32 %v830, 16
        %v880 = vrot.slane %v878, 5
        %v881 = vor.u32 %v877, %v880
        %v882 = vrot.slane %v881, 4
        %v884 = vshll.u32 %v831, 16
        %v886 = vrot.slane %v884, 5
        %v887 = vsel %vm316, %v882, %v886
        %v888 = vshrl.u32 %v831, 16
        %v890 = vrot.slane %v888, 4
        %v891 = vor.u32 %v890, %v886
        %v892 = vrot.slane %v891, 4
        %v894 = vshll.u32 %v849, 16
        %v896 = vrot.slane %v894, 5
        %v897 = vsel %vm316, %v892, %v896
        %v898 = vld [vmem:[%s365] sm:$0xf]
        %v899 = vld [vmem:[%s365 + $0x4] sm:$0xf]
        %v900 = vld [vmem:[%s365 + $0x8] sm:$0xf]
        %v901 = vld [vmem:[%s365 + $0xc] sm:$0xf]
        %v902 = vld [vmem:[%s365 + $0x10] sm:$0xf]
        %v903 = vld [vmem:[%s365 + $0x14] sm:$0xf]
        %v904 = vld [vmem:[%s365 + $0x18] sm:$0xf]
        %v905 = vld [vmem:[%s365 + $0x1c] sm:$0xf]
        %v906 = vld [vmem:[%s365 + $0x20] sm:$0xf]
        %v907 = vld [vmem:[%s365 + $0x24] sm:$0xf]
        %v908 = vld [vmem:[%s365 + $0x28] sm:$0xf]
        %v909 = vld [vmem:[%s365 + $0x2c] sm:$0xf]
        %v910 = vld [vmem:[%s365 + $0x30] sm:$0xf]
        %v911 = vld [vmem:[%s365 + $0x34] sm:$0xf]
        %v912 = vld [vmem:[%s365 + $0x38] sm:$0xf]
        %v913 = vld [vmem:[%s365 + $0x3c] sm:$0xf]
        %v914 = vunpack.c.l.b16 %v863
        %v915 = vunpack.c.l.b16 %v873
        %v916 = vunpack.c.l.b16 %v887
        %v917 = vunpack.c.l.b16 %v897
        %v918 = vpack.c.b16 %v915, %v914
        %v919 = vpack.c.b16 %v917, %v916
        %v938 = vunpack.c.l.b16 %v898
        %v939 = vunpack.c.l.b16 %v899
        %v940 = vunpack.c.l.b16 %v900
        %v941 = vunpack.c.l.b16 %v901
        %v942 = vunpack.c.l.b16 %v902
        %v943 = vunpack.c.l.b16 %v903
        %v944 = vunpack.c.l.b16 %v904
        %v945 = vunpack.c.l.b16 %v905
        %v946 = vunpack.c.l.b16 %v906
        %v947 = vunpack.c.l.b16 %v907
        %v948 = vunpack.c.l.b16 %v908
        %v949 = vunpack.c.l.b16 %v909
        %v950 = vunpack.c.l.b16 %v910
        %v951 = vunpack.c.l.b16 %v911
        %v952 = vunpack.c.l.b16 %v912
        %v953 = vunpack.c.l.b16 %v913
        %v954 = vpack.c.b16 %v939, %v938
        %v955 = vpack.c.b16 %v941, %v940
        %v956 = vpack.c.b16 %v943, %v942
        %v957 = vpack.c.b16 %v945, %v944
        %v958 = vpack.c.b16 %v947, %v946
        %v959 = vpack.c.b16 %v949, %v948
        %v960 = vpack.c.b16 %v951, %v950
        %v961 = vpack.c.b16 %v953, %v952
        %970 = vmatprep.subr.bf16.mxu0 0
        %971 = vmatpush1.bf16.msra.mxu0 %v961
        %972 = vmatprep.subr.bf16.mxu0 0
        %973 = vmatpush1.bf16.msra.mxu0 %v960
        %974 = vmatprep.subr.bf16.mxu0 0
        %975 = vmatpush1.bf16.msra.mxu0 %v959
        %976 = vmatprep.subr.bf16.mxu0 0
        %977 = vmatpush1.bf16.msra.mxu0 %v958
        %978 = vmatprep.subr.bf16.mxu0 0
        %979 = vmatpush1.bf16.msra.mxu0 %v957
        %980 = vmatprep.subr.bf16.mxu0 0
        %981 = vmatpush1.bf16.msra.mxu0 %v956
        %982 = vmatprep.subr.bf16.mxu0 0
        %983 = vmatpush1.bf16.msra.mxu0 %v955
        %984 = vmatprep.subr.bf16.mxu0 0
        %985 = vmatpush1.bf16.msra.mxu0 %v954
        %986 = vmatprep.subr.bf16.mxu0 0
        %987 = vmatpush2.bf16.msra.mxu0 0
        %988 = vmatprep.subr.bf16.mxu0 0
        %989 = vmatpush2.bf16.msra.mxu0 0
        %990 = vmatprep.subr.bf16.mxu0 0
        %991 = vmatpush2.bf16.msra.mxu0 0
        %992 = vmatprep.subr.bf16.mxu0 0
        %993 = vmatpush2.bf16.msra.mxu0 0
        %994 = vmatprep.subr.bf16.mxu0 0
        %995 = vmatpush2.bf16.msra.mxu0 0
        %996 = vmatprep.subr.bf16.mxu0 0
        %997 = vmatpush2.bf16.msra.mxu0 0
        %998 = vmatprep.subr.bf16.mxu0 0
        %999 = vmatpush2.bf16.msra.mxu0 0
        %1000 = vmatprep.subr.bf16.mxu0 0
        %1001 = vmatpush2.bf16.msra.mxu0 0
        %1002 = vmatprep.mubr.bf16.mxu0 0
        %1003 = vmatmul.mubr.bf16.gmra.mxu0 %v918
        %v1004 = vpop.f32.mrf.mxu0
        %v1005 = vadd.f32 0.0, %v1004
        %v1006 = vpop.f32.mrf.mxu0
        %v1007 = vpop.f32.mrf.mxu0
        %v1008 = vadd.f32 0.0, %v1007
        %v1009 = vpop.f32.mrf.mxu0
        %1010 = vmatprep.mubr.bf16.mxu0 0
        %1011 = vmatmul.mubr.bf16.gmra.mxu0 %v919
        %v1012 = vpop.f32.mrf.mxu0
        %v1013 = vadd.f32 0.0, %v1012
        %v1014 = vpop.f32.mrf.mxu0
        %v1015 = vpop.f32.mrf.mxu0
        %v1016 = vadd.f32 0.0, %v1015
        %v1017 = vpop.f32.mrf.mxu0
        %1018 = vdwg.mxu0
        %v1023 = vunpack.c.l.b16 %v828
        %v1024 = vunpack.c.l.b16 %v829
        %v1025 = vunpack.c.l.b16 %v830
        %v1026 = vunpack.c.l.b16 %v831
        %v1027 = vpack.c.b16 %v1024, %v1023
        %v1028 = vpack.c.b16 %v1026, %v1025
        %v1047 = vunpack.c.l.b16 %v832
        %v1048 = vunpack.c.l.b16 %v833
        %v1049 = vunpack.c.l.b16 %v834
        %v1050 = vunpack.c.l.b16 %v835
        %v1051 = vunpack.c.l.b16 %v836
        %v1052 = vunpack.c.l.b16 %v837
        %v1053 = vunpack.c.l.b16 %v838
        %v1054 = vunpack.c.l.b16 %v839
        %v1055 = vunpack.c.l.b16 %v840
        %v1056 = vunpack.c.l.b16 %v841
        %v1057 = vunpack.c.l.b16 %v842
        %v1058 = vunpack.c.l.b16 %v843
        %v1059 = vunpack.c.l.b16 %v844
        %v1060 = vunpack.c.l.b16 %v845
        %v1061 = vunpack.c.l.b16 %v846
        %v1062 = vunpack.c.l.b16 %v847
        %v1063 = vpack.c.b16 %v1048, %v1047
        %v1064 = vpack.c.b16 %v1050, %v1049
        %v1065 = vpack.c.b16 %v1052, %v1051
        %v1066 = vpack.c.b16 %v1054, %v1053
        %v1067 = vpack.c.b16 %v1056, %v1055
        %v1068 = vpack.c.b16 %v1058, %v1057
        %v1069 = vpack.c.b16 %v1060, %v1059
        %v1070 = vpack.c.b16 %v1062, %v1061
        %1079 = vmatprep.subr.bf16.mxu0 0
        %1080 = vmatpush1.bf16.msra.mxu0 %v1070
        %1081 = vmatprep.subr.bf16.mxu0 0
        %1082 = vmatpush1.bf16.msra.mxu0 %v1069
        %1083 = vmatprep.subr.bf16.mxu0 0
        %1084 = vmatpush1.bf16.msra.mxu0 %v1068
        %1085 = vmatprep.subr.bf16.mxu0 0
        %1086 = vmatpush1.bf16.msra.mxu0 %v1067
        %1087 = vmatprep.subr.bf16.mxu0 0
        %1088 = vmatpush1.bf16.msra.mxu0 %v1066
        %1089 = vmatprep.subr.bf16.mxu0 0
        %1090 = vmatpush1.bf16.msra.mxu0 %v1065
        %1091 = vmatprep.subr.bf16.mxu0 0
        %1092 = vmatpush1.bf16.msra.mxu0 %v1064
        %1093 = vmatprep.subr.bf16.mxu0 0
        %1094 = vmatpush1.bf16.msra.mxu0 %v1063
        %1095 = vmatprep.subr.bf16.mxu0 0
        %1096 = vmatpush2.bf16.msra.mxu0 0
        %1097 = vmatprep.subr.bf16.mxu0 0
        %1098 = vmatpush2.bf16.msra.mxu0 0
        %1099 = vmatprep.subr.bf16.mxu0 0
        %1100 = vmatpush2.bf16.msra.mxu0 0
        %1101 = vmatprep.subr.bf16.mxu0 0
        %1102 = vmatpush2.bf16.msra.mxu0 0
        %1103 = vmatprep.subr.bf16.mxu0 0
        %1104 = vmatpush2.bf16.msra.mxu0 0
        %1105 = vmatprep.subr.bf16.mxu0 0
        %1106 = vmatpush2.bf16.msra.mxu0 0
        %1107 = vmatprep.subr.bf16.mxu0 0
        %1108 = vmatpush2.bf16.msra.mxu0 0
        %1109 = vmatprep.subr.bf16.mxu0 0
        %1110 = vmatpush2.bf16.msra.mxu0 0
        %1111 = vmatprep.mubr.bf16.mxu0 0
        %1112 = vmatmul.mubr.bf16.gmra.mxu0 %v1027
        %v1113 = vpop.f32.mrf.mxu0
        %v1114 = vadd.f32 %v1005, %v1113
        %v1115 = vpop.f32.mrf.mxu0
        %v1116 = vpop.f32.mrf.mxu0
        %v1117 = vadd.f32 %v1008, %v1116
        %v1118 = vpop.f32.mrf.mxu0
        %1119 = vmatprep.mubr.bf16.mxu0 0
        %1120 = vmatmul.mubr.bf16.gmra.mxu0 %v1028
        %v1121 = vpop.f32.mrf.mxu0
        %v1122 = vadd.f32 %v1013, %v1121
        %v1123 = vpop.f32.mrf.mxu0
        %v1124 = vpop.f32.mrf.mxu0
        %v1125 = vadd.f32 %v1016, %v1124
        %v1126 = vpop.f32.mrf.mxu0
        %1127 = vdwg.mxu0
        %v1128 = vld [vmem:[#allocation2] sm:$0xe]
        %v1129 = vld [vmem:[#allocation2 + $0xc] sm:$0xe]
        %v1134 = vrot.slane %v1128, 5
        %v1135 = vrot.slane %v1134, 4
        %v1136 = vrot.slane %v829, 5
        %v1137 = vsel %vm604, %v1135, %v1136
        %v1138 = vrot.slane %v1136, 4
        %v1139 = vrot.slane %v848, 5
        %v1140 = vsel %vm604, %v1138, %v1139
        %v1141 = vrot.slane %v1129, 5
        %v1142 = vrot.slane %v1141, 4
        %v1143 = vrot.slane %v831, 5
        %v1144 = vsel %vm604, %v1142, %v1143
        %v1145 = vrot.slane %v1143, 4
        %v1146 = vrot.slane %v849, 5
        %v1147 = vsel %vm604, %v1145, %v1146
        %v1148 = vld [vmem:[%s619] sm:$0xf]
        %v1149 = vld [vmem:[%s619 + $0x4] sm:$0xf]
        %v1150 = vld [vmem:[%s619 + $0x8] sm:$0xf]
        %v1151 = vld [vmem:[%s619 + $0xc] sm:$0xf]
        %v1152 = vld [vmem:[%s619 + $0x10] sm:$0xf]
        %v1153 = vld [vmem:[%s619 + $0x14] sm:$0xf]
        %v1154 = vld [vmem:[%s619 + $0x18] sm:$0xf]
        %v1155 = vld [vmem:[%s619 + $0x1c] sm:$0xf]
        %v1156 = vld [vmem:[%s619 + $0x20] sm:$0xf]
        %v1157 = vld [vmem:[%s619 + $0x24] sm:$0xf]
        %v1158 = vld [vmem:[%s619 + $0x28] sm:$0xf]
        %v1159 = vld [vmem:[%s619 + $0x2c] sm:$0xf]
        %v1160 = vld [vmem:[%s619 + $0x30] sm:$0xf]
        %v1161 = vld [vmem:[%s619 + $0x34] sm:$0xf]
        %v1162 = vld [vmem:[%s619 + $0x38] sm:$0xf]
        %v1163 = vld [vmem:[%s619 + $0x3c] sm:$0xf]
        %v1164 = vunpack.c.l.b16 %v1137
        %v1165 = vunpack.c.l.b16 %v1140
        %v1166 = vunpack.c.l.b16 %v1144
        %v1167 = vunpack.c.l.b16 %v1147
        %v1168 = vpack.c.b16 %v1165, %v1164
        %v1169 = vpack.c.b16 %v1167, %v1166
        %v1188 = vunpack.c.l.b16 %v1148
        %v1189 = vunpack.c.l.b16 %v1149
        %v1190 = vunpack.c.l.b16 %v1150
        %v1191 = vunpack.c.l.b16 %v1151
        %v1192 = vunpack.c.l.b16 %v1152
        %v1193 = vunpack.c.l.b16 %v1153
        %v1194 = vunpack.c.l.b16 %v1154
        %v1195 = vunpack.c.l.b16 %v1155
        %v1196 = vunpack.c.l.b16 %v1156
        %v1197 = vunpack.c.l.b16 %v1157
        %v1198 = vunpack.c.l.b16 %v1158
        %v1199 = vunpack.c.l.b16 %v1159
        %v1200 = vunpack.c.l.b16 %v1160
        %v1201 = vunpack.c.l.b16 %v1161
        %v1202 = vunpack.c.l.b16 %v1162
        %v1203 = vunpack.c.l.b16 %v1163
        %v1204 = vpack.c.b16 %v1189, %v1188
        %v1205 = vpack.c.b16 %v1191, %v1190
        %v1206 = vpack.c.b16 %v1193, %v1192
        %v1207 = vpack.c.b16 %v1195, %v1194
        %v1208 = vpack.c.b16 %v1197, %v1196
        %v1209 = vpack.c.b16 %v1199, %v1198
        %v1210 = vpack.c.b16 %v1201, %v1200
        %v1211 = vpack.c.b16 %v1203, %v1202
        %1220 = vmatprep.subr.bf16.mxu0 0
        %1221 = vmatpush1.bf16.msra.mxu0 %v1211
        %1222 = vmatprep.subr.bf16.mxu0 0
        %1223 = vmatpush1.bf16.msra.mxu0 %v1210
        %1224 = vmatprep.subr.bf16.mxu0 0
        %1225 = vmatpush1.bf16.msra.mxu0 %v1209
        %1226 = vmatprep.subr.bf16.mxu0 0
        %1227 = vmatpush1.bf16.msra.mxu0 %v1208
        %1228 = vmatprep.subr.bf16.mxu0 0
        %1229 = vmatpush1.bf16.msra.mxu0 %v1207
        %1230 = vmatprep.subr.bf16.mxu0 0
        %1231 = vmatpush1.bf16.msra.mxu0 %v1206
        %1232 = vmatprep.subr.bf16.mxu0 0
        %1233 = vmatpush1.bf16.msra.mxu0 %v1205
        %1234 = vmatprep.subr.bf16.mxu0 0
        %1235 = vmatpush1.bf16.msra.mxu0 %v1204
        %1236 = vmatprep.subr.bf16.mxu0 0
        %1237 = vmatpush2.bf16.msra.mxu0 0
        %1238 = vmatprep.subr.bf16.mxu0 0
        %1239 = vmatpush2.bf16.msra.mxu0 0
        %1240 = vmatprep.subr.bf16.mxu0 0
        %1241 = vmatpush2.bf16.msra.mxu0 0
        %1242 = vmatprep.subr.bf16.mxu0 0
        %1243 = vmatpush2.bf16.msra.mxu0 0
        %1244 = vmatprep.subr.bf16.mxu0 0
        %1245 = vmatpush2.bf16.msra.mxu0 0
        %1246 = vmatprep.subr.bf16.mxu0 0
        %1247 = vmatpush2.bf16.msra.mxu0 0
        %1248 = vmatprep.subr.bf16.mxu0 0
        %1249 = vmatpush2.bf16.msra.mxu0 0
        %1250 = vmatprep.subr.bf16.mxu0 0
        %1251 = vmatpush2.bf16.msra.mxu0 0
        %1252 = vmatprep.mubr.bf16.mxu0 0
        %1253 = vmatmul.mubr.bf16.gmra.mxu0 %v1168
        %v1254 = vpop.f32.mrf.mxu0
        %v1255 = vadd.f32 0.0, %v1254
        %v1256 = vpop.f32.mrf.mxu0
        %v1257 = vpop.f32.mrf.mxu0
        %v1258 = vadd.f32 0.0, %v1257
        %v1259 = vpop.f32.mrf.mxu0
        %1260 = vmatprep.mubr.bf16.mxu0 0
        %1261 = vmatmul.mubr.bf16.gmra.mxu0 %v1169
        %v1262 = vpop.f32.mrf.mxu0
        %v1263 = vadd.f32 0.0, %v1262
        %v1264 = vpop.f32.mrf.mxu0
        %v1265 = vpop.f32.mrf.mxu0
        %v1266 = vadd.f32 0.0, %v1265
        %v1267 = vpop.f32.mrf.mxu0
        %1268 = vdwg.mxu0
        %v1269 = vadd.f32 %v1114, %v1255
        %v1270 = vadd.f32 %v1117, %v1258
        %v1271 = vadd.f32 %v1122, %v1263
        %v1272 = vadd.f32 %v1125, %v1266
        %v1273 = vadd.f32 %v1269, %v749
        %v1274 = vadd.f32 %v1270, %v749
        %v1275 = vadd.f32 %v1271, %v749
        %v1276 = vadd.f32 %v1272, %v749
        %v1277 = vmax.f32 %v1273, 0.0
        %v1278 = vmax.f32 %v1274, 0.0
        %v1279 = vmax.f32 %v1275, 0.0
        %v1280 = vmax.f32 %v1276, 0.0
        %v1281 = vadd.f32 %v230, %v1277
        %v1282 = vadd.f32 %v231, %v1278
        %v1283 = vadd.f32 %v232, %v1279
        %v1284 = vadd.f32 %v233, %v1280
        %v1285 = vpack.c.bf16 %v1282, %v1281
        %v1286 = vpack.c.bf16 %v1284, %v1283
        %v1289 = vunpack.c.l.b16 %v1285
        %v1290 = vunpack.c.h.b16 %v1285
        %v1291 = vunpack.c.l.b16 %v1286
        %v1292 = vunpack.c.h.b16 %v1286
        %v1293 = vpack.c.b16 %v1289, %v1289
        %v1294 = vpack.c.b16 %v1290, %v1290
        %v1295 = vpack.c.b16 %v1291, %v1291
        %v1296 = vpack.c.b16 %v1292, %v1292
        %v1298 = vshrl.u32 %v1293, 16
        %v1300 = vrot.slane %v1298, 7
        %v1301 = vshll.u32 %v1293, 16
        %v1303 = vor.u32 %v1300, %v1301
        %v1304 = vrot.slane %v1300, 4
        %v1306 = vshrl.u32 %v1294, 16
        %v1308 = vrot.slane %v1306, 7
        %v1309 = vshll.u32 %v1294, 16
        %v1311 = vor.u32 %v1308, %v1309
        %v1312 = vsel %vm235, %v1304, %v1311
        %v1313 = vrot.slane %v1308, 4
        %v1315 = vshrl.u32 %v1295, 16
        %v1317 = vrot.slane %v1315, 7
        %v1318 = vshll.u32 %v1295, 16
        %v1320 = vor.u32 %v1317, %v1318
        %v1321 = vrot.slane %v1317, 4
        %v1323 = vshrl.u32 %v1296, 16
        %v1325 = vrot.slane %v1323, 7
        %v1326 = vshll.u32 %v1296, 16
        %v1328 = vor.u32 %v1325, %v1326
        %v1329 = vsel %vm235, %v1321, %v1328
        %v1330 = vrot.slane %v1325, 4
        %v1337 = vsel %vm277, %v1303, %v828
        %1338 = vst [vmem:[#allocation2] sm:$0xf] %v1337
        %1339 = vst [vmem:[#allocation2 + $0x4] sm:$0xf] %v1312
        %v1340 = vld [vmem:[#allocation2 + $0x8] sm:$0x1]
        %v1341 = vsel %vm210, %v1313, %v1340
        %1342 = vst [vmem:[#allocation2 + $0x8] sm:$0x1] %v1341
        %v1343 = vld [vmem:[#allocation2 + $0xc] sm:$0xf]
        %v1344 = vsel %vm277, %v1320, %v1343
        %1345 = vst [vmem:[#allocation2 + $0xc] sm:$0xf] %v1344
        %1346 = vst [vmem:[#allocation2 + $0x10] sm:$0xf] %v1329
        %v1347 = vld [vmem:[#allocation2 + $0x14] sm:$0x1]
        %v1348 = vsel %vm210, %v1330, %v1347
        %1349 = vst [vmem:[#allocation2 + $0x14] sm:$0x1] %v1348
        %v1350 = vld [vmem:[#allocation2] sm:$0xf]
        %v1351 = vld [vmem:[#allocation2 + $0x4] sm:$0xf]
        %v1352 = vld [vmem:[#allocation2 + $0xc] sm:$0xf]
        %v1353 = vld [vmem:[#allocation2 + $0x10] sm:$0xf]
        %v1354 = vld [vmem:[#allocation6] sm:$0xf]
        %v1355 = vld [vmem:[#allocation6 + $0x4] sm:$0xf]
        %v1356 = vld [vmem:[#allocation6 + $0x8] sm:$0xf]
        %v1357 = vld [vmem:[#allocation6 + $0xc] sm:$0xf]
        %v1358 = vld [vmem:[#allocation6 + $0x10] sm:$0xf]
        %v1359 = vld [vmem:[#allocation6 + $0x14] sm:$0xf]
        %v1360 = vld [vmem:[#allocation6 + $0x18] sm:$0xf]
        %v1361 = vld [vmem:[#allocation6 + $0x1c] sm:$0xf]
        %v1362 = vld [vmem:[#allocation6 + $0x20] sm:$0xf]
        %v1363 = vld [vmem:[#allocation6 + $0x24] sm:$0xf]
        %v1364 = vld [vmem:[#allocation6 + $0x28] sm:$0xf]
        %v1365 = vld [vmem:[#allocation6 + $0x2c] sm:$0xf]
        %v1366 = vld [vmem:[#allocation6 + $0x30] sm:$0xf]
        %v1367 = vld [vmem:[#allocation6 + $0x34] sm:$0xf]
        %v1368 = vld [vmem:[#allocation6 + $0x38] sm:$0xf]
        %v1369 = vld [vmem:[#allocation6 + $0x3c] sm:$0xf]
        %v1370 = vld [vmem:[#allocation2 + $0x8] sm:$0x1]
        %v1371 = vld [vmem:[#allocation2 + $0x14] sm:$0x1]
        %v1373 = vshrl.u32 %v1350, 16
        %v1375 = vrot.slane %v1373, 4
        %v1376 = vshll.u32 %v1350, 16
        %v1378 = vrot.slane %v1376, 5
        %v1379 = vor.u32 %v1375, %v1378
        %v1380 = vrot.slane %v1379, 4
        %v1382 = vshll.u32 %v1351, 16
        %v1384 = vrot.slane %v1382, 5
        %v1385 = vsel %vm316, %v1380, %v1384
        %v1386 = vshrl.u32 %v1351, 16
        %v1388 = vrot.slane %v1386, 4
        %v1389 = vor.u32 %v1388, %v1384
        %v1390 = vrot.slane %v1389, 4
        %v1392 = vshll.u32 %v1370, 16
        %v1394 = vrot.slane %v1392, 5
        %v1395 = vsel %vm316, %v1390, %v1394
        %v1397 = vshrl.u32 %v1352, 16
        %v1399 = vrot.slane %v1397, 4
        %v1400 = vshll.u32 %v1352, 16
        %v1402 = vrot.slane %v1400, 5
        %v1403 = vor.u32 %v1399, %v1402
        %v1404 = vrot.slane %v1403, 4
        %v1406 = vshll.u32 %v1353, 16
        %v1408 = vrot.slane %v1406, 5
        %v1409 = vsel %vm316, %v1404, %v1408
        %v1410 = vshrl.u32 %v1353, 16
        %v1412 = vrot.slane %v1410, 4
        %v1413 = vor.u32 %v1412, %v1408
        %v1414 = vrot.slane %v1413, 4
        %v1416 = vshll.u32 %v1371, 16
        %v1418 = vrot.slane %v1416, 5
        %v1419 = vsel %vm316, %v1414, %v1418
        %v1420 = vld [vmem:[%s365] sm:$0xf]
        %v1421 = vld [vmem:[%s365 + $0x4] sm:$0xf]
        %v1422 = vld [vmem:[%s365 + $0x8] sm:$0xf]
        %v1423 = vld [vmem:[%s365 + $0xc] sm:$0xf]
        %v1424 = vld [vmem:[%s365 + $0x10] sm:$0xf]
        %v1425 = vld [vmem:[%s365 + $0x14] sm:$0xf]
        %v1426 = vld [vmem:[%s365 + $0x18] sm:$0xf]
        %v1427 = vld [vmem:[%s365 + $0x1c] sm:$0xf]
        %v1428 = vld [vmem:[%s365 + $0x20] sm:$0xf]
        %v1429 = vld [vmem:[%s365 + $0x24] sm:$0xf]
        %v1430 = vld [vmem:[%s365 + $0x28] sm:$0xf]
        %v1431 = vld [vmem:[%s365 + $0x2c] sm:$0xf]
        %v1432 = vld [vmem:[%s365 + $0x30] sm:$0xf]
        %v1433 = vld [vmem:[%s365 + $0x34] sm:$0xf]
        %v1434 = vld [vmem:[%s365 + $0x38] sm:$0xf]
        %v1435 = vld [vmem:[%s365 + $0x3c] sm:$0xf]
        %v1436 = vunpack.c.l.b16 %v1385
        %v1437 = vunpack.c.l.b16 %v1395
        %v1438 = vunpack.c.l.b16 %v1409
        %v1439 = vunpack.c.l.b16 %v1419
        %v1440 = vpack.c.b16 %v1437, %v1436
        %v1441 = vpack.c.b16 %v1439, %v1438
        %v1460 = vunpack.c.l.b16 %v1420
        %v1461 = vunpack.c.l.b16 %v1421
        %v1462 = vunpack.c.l.b16 %v1422
        %v1463 = vunpack.c.l.b16 %v1423
        %v1464 = vunpack.c.l.b16 %v1424
        %v1465 = vunpack.c.l.b16 %v1425
        %v1466 = vunpack.c.l.b16 %v1426
        %v1467 = vunpack.c.l.b16 %v1427
        %v1468 = vunpack.c.l.b16 %v1428
        %v1469 = vunpack.c.l.b16 %v1429
        %v1470 = vunpack.c.l.b16 %v1430
        %v1471 = vunpack.c.l.b16 %v1431
        %v1472 = vunpack.c.l.b16 %v1432
        %v1473 = vunpack.c.l.b16 %v1433
        %v1474 = vunpack.c.l.b16 %v1434
        %v1475 = vunpack.c.l.b16 %v1435
        %v1476 = vpack.c.b16 %v1461, %v1460
        %v1477 = vpack.c.b16 %v1463, %v1462
        %v1478 = vpack.c.b16 %v1465, %v1464
        %v1479 = vpack.c.b16 %v1467, %v1466
        %v1480 = vpack.c.b16 %v1469, %v1468
        %v1481 = vpack.c.b16 %v1471, %v1470
        %v1482 = vpack.c.b16 %v1473, %v1472
        %v1483 = vpack.c.b16 %v1475, %v1474
        %1492 = vmatprep.subr.bf16.mxu0 0
        %1493 = vmatpush1.bf16.msra.mxu0 %v1483
        %1494 = vmatprep.subr.bf16.mxu0 0
        %1495 = vmatpush1.bf16.msra.mxu0 %v1482
        %1496 = vmatprep.subr.bf16.mxu0 0
        %1497 = vmatpush1.bf16.msra.mxu0 %v1481
        %1498 = vmatprep.subr.bf16.mxu0 0
        %1499 = vmatpush1.bf16.msra.mxu0 %v1480
        %1500 = vmatprep.subr.bf16.mxu0 0
        %1501 = vmatpush1.bf16.msra.mxu0 %v1479
        %1502 = vmatprep.subr.bf16.mxu0 0
        %1503 = vmatpush1.bf16.msra.mxu0 %v1478
        %1504 = vmatprep.subr.bf16.mxu0 0
        %1505 = vmatpush1.bf16.msra.mxu0 %v1477
        %1506 = vmatprep.subr.bf16.mxu0 0
        %1507 = vmatpush1.bf16.msra.mxu0 %v1476
        %1508 = vmatprep.subr.bf16.mxu0 0
        %1509 = vmatpush2.bf16.msra.mxu0 0
        %1510 = vmatprep.subr.bf16.mxu0 0
        %1511 = vmatpush2.bf16.msra.mxu0 0
        %1512 = vmatprep.subr.bf16.mxu0 0
        %1513 = vmatpush2.bf16.msra.mxu0 0
        %1514 = vmatprep.subr.bf16.mxu0 0
        %1515 = vmatpush2.bf16.msra.mxu0 0
        %1516 = vmatprep.subr.bf16.mxu0 0
        %1517 = vmatpush2.bf16.msra.mxu0 0
        %1518 = vmatprep.subr.bf16.mxu0 0
        %1519 = vmatpush2.bf16.msra.mxu0 0
        %1520 = vmatprep.subr.bf16.mxu0 0
        %1521 = vmatpush2.bf16.msra.mxu0 0
        %1522 = vmatprep.subr.bf16.mxu0 0
        %1523 = vmatpush2.bf16.msra.mxu0 0
        %1524 = vmatprep.mubr.bf16.mxu0 0
        %1525 = vmatmul.mubr.bf16.gmra.mxu0 %v1440
        %v1526 = vpop.f32.mrf.mxu0
        %v1527 = vadd.f32 0.0, %v1526
        %v1528 = vpop.f32.mrf.mxu0
        %v1529 = vpop.f32.mrf.mxu0
        %v1530 = vadd.f32 0.0, %v1529
        %v1531 = vpop.f32.mrf.mxu0
        %1532 = vmatprep.mubr.bf16.mxu0 0
        %1533 = vmatmul.mubr.bf16.gmra.mxu0 %v1441
        %v1534 = vpop.f32.mrf.mxu0
        %v1535 = vadd.f32 0.0, %v1534
        %v1536 = vpop.f32.mrf.mxu0
        %v1537 = vpop.f32.mrf.mxu0
        %v1538 = vadd.f32 0.0, %v1537
        %v1539 = vpop.f32.mrf.mxu0
        %1540 = vdwg.mxu0
        %v1545 = vunpack.c.l.b16 %v1350
        %v1546 = vunpack.c.l.b16 %v1351
        %v1547 = vunpack.c.l.b16 %v1352
        %v1548 = vunpack.c.l.b16 %v1353
        %v1549 = vpack.c.b16 %v1546, %v1545
        %v1550 = vpack.c.b16 %v1548, %v1547
        %v1569 = vunpack.c.l.b16 %v1354
        %v1570 = vunpack.c.l.b16 %v1355
        %v1571 = vunpack.c.l.b16 %v1356
        %v1572 = vunpack.c.l.b16 %v1357
        %v1573 = vunpack.c.l.b16 %v1358
        %v1574 = vunpack.c.l.b16 %v1359
        %v1575 = vunpack.c.l.b16 %v1360
        %v1576 = vunpack.c.l.b16 %v1361
        %v1577 = vunpack.c.l.b16 %v1362
        %v1578 = vunpack.c.l.b16 %v1363
        %v1579 = vunpack.c.l.b16 %v1364
        %v1580 = vunpack.c.l.b16 %v1365
        %v1581 = vunpack.c.l.b16 %v1366
        %v1582 = vunpack.c.l.b16 %v1367
        %v1583 = vunpack.c.l.b16 %v1368
        %v1584 = vunpack.c.l.b16 %v1369
        %v1585 = vpack.c.b16 %v1570, %v1569
        %v1586 = vpack.c.b16 %v1572, %v1571
        %v1587 = vpack.c.b16 %v1574, %v1573
        %v1588 = vpack.c.b16 %v1576, %v1575
        %v1589 = vpack.c.b16 %v1578, %v1577
        %v1590 = vpack.c.b16 %v1580, %v1579
        %v1591 = vpack.c.b16 %v1582, %v1581
        %v1592 = vpack.c.b16 %v1584, %v1583
        %1601 = vmatprep.subr.bf16.mxu0 0
        %1602 = vmatpush1.bf16.msra.mxu0 %v1592
        %1603 = vmatprep.subr.bf16.mxu0 0
        %1604 = vmatpush1.bf16.msra.mxu0 %v1591
        %1605 = vmatprep.subr.bf16.mxu0 0
        %1606 = vmatpush1.bf16.msra.mxu0 %v1590
        %1607 = vmatprep.subr.bf16.mxu0 0
        %1608 = vmatpush1.bf16.msra.mxu0 %v1589
        %1609 = vmatprep.subr.bf16.mxu0 0
        %1610 = vmatpush1.bf16.msra.mxu0 %v1588
        %1611 = vmatprep.subr.bf16.mxu0 0
        %1612 = vmatpush1.bf16.msra.mxu0 %v1587
        %1613 = vmatprep.subr.bf16.mxu0 0
        %1614 = vmatpush1.bf16.msra.mxu0 %v1586
        %1615 = vmatprep.subr.bf16.mxu0 0
        %1616 = vmatpush1.bf16.msra.mxu0 %v1585
        %1617 = vmatprep.subr.bf16.mxu0 0
        %1618 = vmatpush2.bf16.msra.mxu0 0
        %1619 = vmatprep.subr.bf16.mxu0 0
        %1620 = vmatpush2.bf16.msra.mxu0 0
        %1621 = vmatprep.subr.bf16.mxu0 0
        %1622 = vmatpush2.bf16.msra.mxu0 0
        %1623 = vmatprep.subr.bf16.mxu0 0
        %1624 = vmatpush2.bf16.msra.mxu0 0
        %1625 = vmatprep.subr.bf16.mxu0 0
        %1626 = vmatpush2.bf16.msra.mxu0 0
        %1627 = vmatprep.subr.bf16.mxu0 0
        %1628 = vmatpush2.bf16.msra.mxu0 0
        %1629 = vmatprep.subr.bf16.mxu0 0
        %1630 = vmatpush2.bf16.msra.mxu0 0
        %1631 = vmatprep.subr.bf16.mxu0 0
        %1632 = vmatpush2.bf16.msra.mxu0 0
        %1633 = vmatprep.mubr.bf16.mxu0 0
        %1634 = vmatmul.mubr.bf16.gmra.mxu0 %v1549
        %v1635 = vpop.f32.mrf.mxu0
        %v1636 = vadd.f32 %v1527, %v1635
        %v1637 = vpop.f32.mrf.mxu0
        %v1638 = vpop.f32.mrf.mxu0
        %v1639 = vadd.f32 %v1530, %v1638
        %v1640 = vpop.f32.mrf.mxu0
        %1641 = vmatprep.mubr.bf16.mxu0 0
        %1642 = vmatmul.mubr.bf16.gmra.mxu0 %v1550
        %v1643 = vpop.f32.mrf.mxu0
        %v1644 = vadd.f32 %v1535, %v1643
        %v1645 = vpop.f32.mrf.mxu0
        %v1646 = vpop.f32.mrf.mxu0
        %v1647 = vadd.f32 %v1538, %v1646
        %v1648 = vpop.f32.mrf.mxu0
        %1649 = vdwg.mxu0
        %v1650 = vld [vmem:[#allocation2] sm:$0xe]
        %v1651 = vld [vmem:[#allocation2 + $0xc] sm:$0xe]
        %v1656 = vrot.slane %v1650, 5
        %v1657 = vrot.slane %v1656, 4
        %v1658 = vrot.slane %v1351, 5
        %v1659 = vsel %vm604, %v1657, %v1658
        %v1660 = vrot.slane %v1658, 4
        %v1661 = vrot.slane %v1370, 5
        %v1662 = vsel %vm604, %v1660, %v1661
        %v1663 = vrot.slane %v1651, 5
        %v1664 = vrot.slane %v1663, 4
        %v1665 = vrot.slane %v1353, 5
        %v1666 = vsel %vm604, %v1664, %v1665
        %v1667 = vrot.slane %v1665, 4
        %v1668 = vrot.slane %v1371, 5
        %v1669 = vsel %vm604, %v1667, %v1668
        %v1670 = vld [vmem:[%s619] sm:$0xf]
        %v1671 = vld [vmem:[%s619 + $0x4] sm:$0xf]
        %v1672 = vld [vmem:[%s619 + $0x8] sm:$0xf]
        %v1673 = vld [vmem:[%s619 + $0xc] sm:$0xf]
        %v1674 = vld [vmem:[%s619 + $0x10] sm:$0xf]
        %v1675 = vld [vmem:[%s619 + $0x14] sm:$0xf]
        %v1676 = vld [vmem:[%s619 + $0x18] sm:$0xf]
        %v1677 = vld [vmem:[%s619 + $0x1c] sm:$0xf]
        %v1678 = vld [vmem:[%s619 + $0x20] sm:$0xf]
        %v1679 = vld [vmem:[%s619 + $0x24] sm:$0xf]
        %v1680 = vld [vmem:[%s619 + $0x28] sm:$0xf]
        %v1681 = vld [vmem:[%s619 + $0x2c] sm:$0xf]
        %v1682 = vld [vmem:[%s619 + $0x30] sm:$0xf]
        %v1683 = vld [vmem:[%s619 + $0x34] sm:$0xf]
        %v1684 = vld [vmem:[%s619 + $0x38] sm:$0xf]
        %v1685 = vld [vmem:[%s619 + $0x3c] sm:$0xf]
        %v1686 = vunpack.c.l.b16 %v1659
        %v1687 = vunpack.c.l.b16 %v1662
        %v1688 = vunpack.c.l.b16 %v1666
        %v1689 = vunpack.c.l.b16 %v1669
        %v1690 = vpack.c.b16 %v1687, %v1686
        %v1691 = vpack.c.b16 %v1689, %v1688
        %v1710 = vunpack.c.l.b16 %v1670
        %v1711 = vunpack.c.l.b16 %v1671
        %v1712 = vunpack.c.l.b16 %v1672
        %v1713 = vunpack.c.l.b16 %v1673
        %v1714 = vunpack.c.l.b16 %v1674
        %v1715 = vunpack.c.l.b16 %v1675
        %v1716 = vunpack.c.l.b16 %v1676
        %v1717 = vunpack.c.l.b16 %v1677
        %v1718 = vunpack.c.l.b16 %v1678
        %v1719 = vunpack.c.l.b16 %v1679
        %v1720 = vunpack.c.l.b16 %v1680
        %v1721 = vunpack.c.l.b16 %v1681
        %v1722 = vunpack.c.l.b16 %v1682
        %v1723 = vunpack.c.l.b16 %v1683
        %v1724 = vunpack.c.l.b16 %v1684
        %v1725 = vunpack.c.l.b16 %v1685
        %v1726 = vpack.c.b16 %v1711, %v1710
        %v1727 = vpack.c.b16 %v1713, %v1712
        %v1728 = vpack.c.b16 %v1715, %v1714
        %v1729 = vpack.c.b16 %v1717, %v1716
        %v1730 = vpack.c.b16 %v1719, %v1718
        %v1731 = vpack.c.b16 %v1721, %v1720
        %v1732 = vpack.c.b16 %v1723, %v1722
        %v1733 = vpack.c.b16 %v1725, %v1724
        %1742 = vmatprep.subr.bf16.mxu0 0
        %1743 = vmatpush1.bf16.msra.mxu0 %v1733
        %1744 = vmatprep.subr.bf16.mxu0 0
        %1745 = vmatpush1.bf16.msra.mxu0 %v1732
        %1746 = vmatprep.subr.bf16.mxu0 0
        %1747 = vmatpush1.bf16.msra.mxu0 %v1731
        %1748 = vmatprep.subr.bf16.mxu0 0
        %1749 = vmatpush1.bf16.msra.mxu0 %v1730
        %1750 = vmatprep.subr.bf16.mxu0 0
        %1751 = vmatpush1.bf16.msra.mxu0 %v1729
        %1752 = vmatprep.subr.bf16.mxu0 0
        %1753 = vmatpush1.bf16.msra.mxu0 %v1728
        %1754 = vmatprep.subr.bf16.mxu0 0
        %1755 = vmatpush1.bf16.msra.mxu0 %v1727
        %1756 = vmatprep.subr.bf16.mxu0 0
        %1757 = vmatpush1.bf16.msra.mxu0 %v1726
        %1758 = vmatprep.subr.bf16.mxu0 0
        %1759 = vmatpush2.bf16.msra.mxu0 0
        %1760 = vmatprep.subr.bf16.mxu0 0
        %1761 = vmatpush2.bf16.msra.mxu0 0
        %1762 = vmatprep.subr.bf16.mxu0 0
        %1763 = vmatpush2.bf16.msra.mxu0 0
        %1764 = vmatprep.subr.bf16.mxu0 0
        %1765 = vmatpush2.bf16.msra.mxu0 0
        %1766 = vmatprep.subr.bf16.mxu0 0
        %1767 = vmatpush2.bf16.msra.mxu0 0
        %1768 = vmatprep.subr.bf16.mxu0 0
        %1769 = vmatpush2.bf16.msra.mxu0 0
        %1770 = vmatprep.subr.bf16.mxu0 0
        %1771 = vmatpush2.bf16.msra.mxu0 0
        %1772 = vmatprep.subr.bf16.mxu0 0
        %1773 = vmatpush2.bf16.msra.mxu0 0
        %1774 = vmatprep.mubr.bf16.mxu0 0
        %1775 = vmatmul.mubr.bf16.gmra.mxu0 %v1690
        %v1776 = vpop.f32.mrf.mxu0
        %v1777 = vadd.f32 0.0, %v1776
        %v1778 = vpop.f32.mrf.mxu0
        %v1779 = vpop.f32.mrf.mxu0
        %v1780 = vadd.f32 0.0, %v1779
        %v1781 = vpop.f32.mrf.mxu0
        %1782 = vmatprep.mubr.bf16.mxu0 0
        %1783 = vmatmul.mubr.bf16.gmra.mxu0 %v1691
        %v1784 = vpop.f32.mrf.mxu0
        %v1785 = vadd.f32 0.0, %v1784
        %v1786 = vpop.f32.mrf.mxu0
        %v1787 = vpop.f32.mrf.mxu0
        %v1788 = vadd.f32 0.0, %v1787
        %v1789 = vpop.f32.mrf.mxu0
        %1790 = vdwg.mxu0
        %v1791 = vadd.f32 %v1636, %v1777
        %v1792 = vadd.f32 %v1639, %v1780
        %v1793 = vadd.f32 %v1644, %v1785
        %v1794 = vadd.f32 %v1647, %v1788
        %v1795 = vadd.f32 %v1791, %v749
        %v1796 = vadd.f32 %v1792, %v749
        %v1797 = vadd.f32 %v1793, %v749
        %v1798 = vadd.f32 %v1794, %v749
        %v1799 = vmax.f32 %v1795, 0.0
        %v1800 = vmax.f32 %v1796, 0.0
        %v1801 = vmax.f32 %v1797, 0.0
        %v1802 = vmax.f32 %v1798, 0.0
        %1803 = vst [vmem:[%s204] sm:$0xff] %v1799
        %1804 = vst [vmem:[%s204 + $0x8] sm:$0xff] %v1800
        %1805 = vst [vmem:[%s204 + $0x10] sm:$0xff] %v1801
        %1806 = vst [vmem:[%s204 + $0x18] sm:$0xff] %v1802
        %s1807 = sand.u32 %s97, 1
        %s1808 = scalar_lea.sflag [#allocation5], %s1807
        %s1809 = sand.u32 %s97, 1
        %s1810 = smul.addr %s1809, 32
        %s1811 = scalar_lea.vmem [#allocation8], %s1810
        // Predicated region
        $region41: #{tpu_custom_call.1} parent=31 // pred_check
          %p1812 = pneg %p107
        $region42: #{tpu_custom_call.1} parent=31 // pred_check_branch
          %1814 = sbr.rel (%p1812) target = $region44
        $region43: #{tpu_custom_call.1} parent=31 // pred_region
          %s1815 = smul.u32 2, %s21
          %s1817 = ssub.s32 512, 512
          %1818 = vsyncadd %s1808, %s1817
          %s1819 = smul.addr %s1815, 2
          %s1820 = smul.addr %s1819, 128
          %s1821 = scalar_lea.hbm %s3, %s1820
          %s1822 = sshll.u32 %s1811, 4
          %s1823 = int_to_ptr.vmem [resolvable:$true] %s1822
          %1828 = dma.vmem_to_hbm [thread:$0]  %s1823, 512, %s1821, %s1808, 128, 128, 8
        $region44: #{tpu_custom_call.1} parent=31 // pred_fallthru
          _
      $region32: #{tpu_custom_call.1} parent=5 // pred_fallthru
        _
      %p1829 = scmp.le.s32.totalorder 2, %s16
      // Predicated region
      $region45: #{tpu_custom_call.1} parent=5 // pred_check
        %p1830 = pneg %p1829
      $region46: #{tpu_custom_call.1} parent=5 // pred_check_branch
        %1832 = sbr.rel (%p1830) target = $region48
      $region47: #{tpu_custom_call.1} parent=5 // pred_region
        %s1833 = ssub.s32 %s16, 2
        // Predicated region
        $region49: #{tpu_custom_call.1} parent=47 // pred_check
          %p1834 = pneg %p113
        $region50: #{tpu_custom_call.1} parent=47 // pred_check_branch
          %1836 = sbr.rel (%p1834) target = $region52
        $region51: #{tpu_custom_call.1} parent=47 // pred_region
          %s1837 = sand.u32 %s98, 1
          %s1838 = scalar_lea.sflag [#allocation5], %s1837
          %s1839 = sand.u32 %s98, 1
          %s1840 = smul.addr %s1839, 32
          %s1841 = scalar_lea.vmem [#allocation8], %s1840
          %1842 = dma.done %s1838, 512
        $region52: #{tpu_custom_call.1} parent=47 // pred_fallthru
          _
      $region48: #{tpu_custom_call.1} parent=5 // pred_fallthru
        _
    $region6: #{tpu_custom_call.1} parent=1 // loop_footer
      %s20 = sadd.s32 1, %s16
    $region7: #{tpu_custom_call.1} parent=1 // loop_footer_branch
      %15 = sbr.rel target = $region3
    $region8: #{tpu_custom_call.1} parent=1 // loop_exit
      _
    %1843 = vsyncpa [#allocation4], 1
    %s1844 = scalar_lea.sflag [#allocation4], 1
    %1845 = vsyncpa %s1844, 1
    %1846 = vsyncpa [#allocation7], 1
    %1847 = vsyncpa [#allocation5], 1
    %s1848 = scalar_lea.sflag [#allocation5], 1
    %1849 = vsyncpa %s1848, 1

</llo_original>
